<compile_context>
chip_gen: v7x
topology: tpu7x:2x2x1
jax: 0.10.0
libtpu: 0.0.40
codegen_flags: <defaults>
</compile_context>

<pallas_src>
import jax
import jax.numpy as jnp
import numpy as np
from jax.experimental import pallas as pl
from jax.experimental.pallas import tpu as pltpu

IN_F = 11
HID = 32
OUT_F = 3
N_NODES = 16
T_STEPS = 4
LANES = 128      # single 128-lane gate block
XK = 16          # sublane (K) padding for the x-path weights (11 real rows)
CK = 8           # sublane (K) padding for the carry weights (6 real rows)


# ----------------------------------------------------------------------------
# Synthetic graph construction (mirrors build_edge_index; unused for K=1).
# ----------------------------------------------------------------------------
def build_edge_index(conn, labels):
    idx = {int(lbl): i for i, lbl in enumerate(labels)}
    edges = set()
    for elem in conn:
        elem = list(elem)
        if len(elem) == 8:
            b, t = elem[:4], elem[4:]
            for k in range(4):
                edges |= {
                    (idx[b[k]], idx[b[(k + 1) % 4]]),
                    (idx[t[k]], idx[t[(k + 1) % 4]]),
                    (idx[b[k]], idx[t[k]]),
                }
        else:
            m = len(elem)
            for k in range(m):
                edges.add((idx[elem[k]], idx[elem[(k + 1) % m]]))
    edges |= {(j, i) for i, j in edges}
    e = np.array(sorted(edges), dtype=np.int32).T
    return jnp.asarray(e)


# ----------------------------------------------------------------------------
# Fused Pallas kernel: all T GRU steps + linear head + autoregressive feedback.
# ----------------------------------------------------------------------------
def autoreg_fused_kernel(x_ref, rdt_ref, uv0_ref, wx_ref, wuv_ref, whf_ref,
                         whh_ref, b_ref, u_out_ref):
    # x_ref    : [T*N, 16]   original features (rows 3:6 / 8:11 zero-weighted)
    # rdt_ref  : [max(T-1,1), N, 8]  1/dt pre-broadcast into lanes 3:6
    # uv0_ref  : [2, N, 8]   row0 = [x0[:,3:6] | x0[:,8:11] | 0]  (carry LHS)
    #                        row1 = [x0[:,3:6] | x0[:,3:6]  | 0]  (u-dup)
    # wx_ref   : [16, 128]   static x->gate weights; cols [0 | z | r | cand]
    # wuv_ref  : [8, 128]    carry->gate weights (Wx rows 3:6 at K 0:3,
    #                        rows 8:11 at K 3:6)
    # whf_ref  : [32, 128]   h -> [wo | wo | 0 | whz | whr | 0] (cols 0:3, 3:6,
    #                        32:64, 64:96)
    # whh_ref  : [32, 32]    candidate h-path weight
    # b_ref    : [2, 128]    row0 = gate biases (cols 32:128), row1 = head bias
    # u_out_ref: [T, N, 128] lanes 0:3 = head output u_t
    f32 = jnp.float32
    T = u_out_ref.shape[0]
    n = u_out_ref.shape[1]

    wx = wx_ref[...]
    w_uv = wuv_ref[...]
    w_hf = whf_ref[...]
    w_hh = whh_ref[...]
    b_all = b_ref[...]

    # Hoisted: static x-path pre-activations for ALL steps in one matmul
    # (M = T*N = 64), gate bias folded in (single broadcast).
    gx_all = (jnp.dot(x_ref[...], wx, preferred_element_type=f32)
              + b_all[0:1, :])                                   # [T*N, 128]
    bo_b = jnp.broadcast_to(b_all[1:2, :], (n, LANES))           # head bias

    lane8 = jax.lax.broadcasted_iota(jnp.int32, (n, CK), 1)
    sel_u = (lane8 < OUT_F).astype(f32)                          # [1,1,1,0,...]

    h = jnp.zeros((n, HID), f32)                                 # hidden state
    gh = jnp.zeros((n, LANES), f32)                              # h-path z|r pre-acts
    carry = uv0_ref[0]                                           # [N, 8]
    u_dup = uv0_ref[1]                                           # [N, 8]

    # T is a small static constant -> fully unrolled.
    for t in range(T):
        pre = (gx_all[t * n:(t + 1) * n, :]
               + jnp.dot(carry, w_uv, preferred_element_type=f32)
               + gh)                                             # [N, 128]
        z = jax.nn.sigmoid(pre[:, 32:64])                        # [N, 32]
        r = jax.nn.sigmoid(pre[:, 64:96])                        # [N, 32]
        cand = jnp.tanh(pre[:, 96:128]
                        + jnp.dot(r * h, w_hh,
                                  preferred_element_type=f32))   # [N, 32]
        h = z * h + (1.0 - z) * cand                             # [N, 32]
        # Fused head + next-step (z|r) h-path matmul (shared LHS = new h).
        gh = jnp.dot(h, w_hf, preferred_element_type=f32)        # [N, 128]
        u_full = gh + bo_b                                       # lanes 0:3 (& 3:6) = u_t
        u_out_ref[t] = u_full                                    # lane-dense store
        if t < T - 1:
            u_b = u_full[:, 0:CK]                                # [u | u | 0 0]
            # next carry: lanes 0:3 = u_t, lanes 3:6 = (u_t - X[t][:,3:6]) / dt
            carry = u_b * sel_u + (u_b - u_dup) * rdt_ref[t]
            u_dup = u_b


# ----------------------------------------------------------------------------
# Parameter packing into compact slabs (done ONCE, outside the per-call jit).
# ----------------------------------------------------------------------------
def pack_params(params):
    f32 = jnp.float32
    # Full x->gates weight; gate g occupies lanes [32+32*g, 64+32*g).
    wx_full = jnp.zeros((IN_F, LANES), f32)
    wx_full = wx_full.at[:, 32:64].set(params["wxz"])
    wx_full = wx_full.at[:, 64:96].set(params["wxr"])
    wx_full = wx_full.at[:, 96:128].set(params["wxh"])

    # Static part: rows 3:6 / 8:11 are fed through the carry path instead.
    wx_static = jnp.zeros((XK, LANES), f32).at[:IN_F].set(wx_full)
    wx_static = wx_static.at[3:6].set(0.0).at[8:11].set(0.0)

    # Merged carry weight: u slot (x cols 3:6) at K rows 0:3, v slot (8:11) at 3:6.
    w_uv = jnp.zeros((CK, LANES), f32)
    w_uv = w_uv.at[0:3].set(wx_full[3:6]).at[3:6].set(wx_full[8:11])

    # Fused h-path + head: wo duplicated at cols 0:3 and 3:6, whz at 32:64,
    # whr at 64:96, zeros elsewhere.
    w_hf = jnp.zeros((HID, LANES), f32)
    w_hf = w_hf.at[:, 0:3].set(params["wo"]).at[:, 3:6].set(params["wo"])
    w_hf = w_hf.at[:, 32:64].set(params["whz"]).at[:, 64:96].set(params["whr"])

    w_hh = params["whh"].astype(f32)                              # [32, 32]

    b2 = jnp.zeros((2, LANES), f32)
    b2 = b2.at[0, 32:64].set(params["bz"][0])
    b2 = b2.at[0, 64:96].set(params["br"][0])
    b2 = b2.at[0, 96:128].set(params["bh"][0])
    b2 = b2.at[1, 0:3].set(params["bo"][0]).at[1, 3:6].set(params["bo"][0])
    return wx_static, w_uv, w_hf, w_hh, b2


# ----------------------------------------------------------------------------
# Full AutoregU forward: one fused pallas_call, no grid (everything in VMEM).
# ----------------------------------------------------------------------------
@jax.jit
def autoreg_u_forward(X_seq, packed):
    wx_static, w_uv, w_hf, w_hh, b2 = packed
    T, N, F = X_seq.shape
    f32 = jnp.float32

    x_flat = jnp.zeros((T * N, XK), f32).at[:, :F].set(
        X_seq.reshape(T * N, F).astype(f32))

    if T > 1:
        rdt_col = 1.0 / (X_seq[1:, :, 6] - X_seq[:-1, :, 6])      # [T-1, N]
        rdt = jnp.zeros((T - 1, N, CK), f32).at[:, :, 3:6].set(
            rdt_col[:, :, None])
    else:
        rdt = jnp.zeros((1, N, CK), f32)

    u0 = X_seq[0, :, 3:6]
    v0 = X_seq[0, :, 8:11]
    uv0 = jnp.zeros((2, N, CK), f32)
    uv0 = uv0.at[0, :, 0:3].set(u0).at[0, :, 3:6].set(v0)
    uv0 = uv0.at[1, :, 0:3].set(u0).at[1, :, 3:6].set(u0)

    vmem = lambda: pl.BlockSpec(memory_space=pltpu.MemorySpace.VMEM)
    u_pad = pl.pallas_call(
        autoreg_fused_kernel,
        out_shape=jax.ShapeDtypeStruct((T, N, LANES), f32),
        in_specs=[vmem() for _ in range(8)],
        out_specs=vmem(),
    )(x_flat, rdt, uv0, wx_static, w_uv, w_hf, w_hh, b2)
    return u_pad[:, :, :OUT_F]                                    # [T, N, 3]


# ----------------------------------------------------------------------------
# Pure-JAX reference (unfused, per-gate math) for correctness check.
# ----------------------------------------------------------------------------
def gru_step_ref(x, h, p):
    z = jax.nn.sigmoid(x @ p["wxz"] + h @ p["whz"] + p["bz"])
    r = jax.nn.sigmoid(x @ p["wxr"] + h @ p["whr"] + p["br"])
    h_tilde = jnp.tanh(x @ p["wxh"] + (h * r) @ p["whh"] + p["bh"])
    h_new = z * h + (1.0 - z) * h_tilde
    return h_new, h_new @ p["wo"] + p["bo"]


def autoreg_u_forward_ref(X_seq, params):
    T, N, _ = X_seq.shape
    h = jnp.zeros((N, HID), dtype=jnp.float32)
    Xmod = X_seq
    outs = []
    for t in range(T):
        xt = Xmod[t]
        h, u = gru_step_ref(xt, h, params)
        outs.append(u)
        if t < T - 1:
            dt_t = X_seq[t + 1][:, 6] - X_seq[t][:, 6]
            v = (u - xt[:, 3:6]) / dt_t[:, None]
            x_next = Xmod[t + 1].at[:, 3:6].set(u).at[:, 8:11].set(v)
            Xmod = Xmod.at[t + 1].set(x_next)
    return jnp.stack(outs)


# ----------------------------------------------------------------------------
# Deterministic parameter init (GConvGRU(11, 32, K=1) + linear head; the
# additive x-path / h-path ChebConv biases of each gate are merged).
# ----------------------------------------------------------------------------
def init_params(key):
    ks = jax.random.split(key, 8)
    s_x = 1.0 / np.sqrt(IN_F)
    s_h = 1.0 / np.sqrt(HID)
    return {
        "wxz": jax.random.normal(ks[0], (IN_F, HID), jnp.float32) * s_x,
        "whz": jax.random.normal(ks[1], (HID, HID), jnp.float32) * s_h,
        "bz":  jnp.zeros((1, HID), jnp.float32),
        "wxr": jax.random.normal(ks[2], (IN_F, HID), jnp.float32) * s_x,
        "whr": jax.random.normal(ks[3], (HID, HID), jnp.float32) * s_h,
        "br":  jnp.zeros((1, HID), jnp.float32),
        "wxh": jax.random.normal(ks[4], (IN_F, HID), jnp.float32) * s_x,
        "whh": jax.random.normal(ks[5], (HID, HID), jnp.float32) * s_h,
        "bh":  jnp.zeros((1, HID), jnp.float32),
        "wo":  jax.random.normal(ks[6], (HID, OUT_F), jnp.float32) * s_h,
        "bo":  jax.random.normal(ks[7], (1, OUT_F), jnp.float32) * 0.1,
    }


if __name__ == "__main__":
    key = jax.random.PRNGKey(0)
    k_x, k_p = jax.random.split(key)

    # Synthetic mesh: three 8-node hex elements sharing faces (16 labels).
    labels = np.arange(N_NODES, dtype=np.int32)
    conn = np.array([[0, 1, 2, 3, 4, 5, 6, 7],
                     [4, 5, 6, 7, 8, 9, 10, 11],
                     [8, 9, 10, 11, 12, 13, 14, 15]], dtype=np.int32)
    edge = build_edge_index(conn, labels)   # unused by the math for K=1

    # X_seq: [T, N, 11]; feature 6 is "time", strictly increasing so dt != 0.
    X_seq = jax.random.normal(k_x, (T_STEPS, N_NODES, IN_F), jnp.float32)
    times = jnp.arange(T_STEPS, dtype=jnp.float32)[:, None] * 0.1 + 1.0
    X_seq = X_seq.at[:, :, 6].set(jnp.broadcast_to(times, (T_STEPS, N_NODES)))

    params = init_params(k_p)
    packed = pack_params(params)            # packed once, reused across calls

    out = autoreg_u_forward(X_seq, packed)
    out = jax.block_until_ready(out)        # [T, N, 3]

    ref = autoreg_u_forward_ref(X_seq, params)
    assert out.shape == (T_STEPS, N_NODES, OUT_F)
    np.testing.assert_allclose(np.asarray(out), np.asarray(ref),
                               rtol=1e-3, atol=1e-3)
    print("KERNEL_OK")
</pallas_src>

<mosaic_0001>
module attributes {stable_mosaic.version = 11 : i64} {
  func.func @autoreg_fused_kernel(%arg0: memref<64x16xf32, #tpu.memory_space<vmem>>, %arg1: memref<3x16x8xf32, #tpu.memory_space<vmem>>, %arg2: memref<2x16x8xf32, #tpu.memory_space<vmem>>, %arg3: memref<16x128xf32, #tpu.memory_space<vmem>>, %arg4: memref<8x128xf32, #tpu.memory_space<vmem>>, %arg5: memref<32x128xf32, #tpu.memory_space<vmem>>, %arg6: memref<32x32xf32, #tpu.memory_space<vmem>>, %arg7: memref<2x128xf32, #tpu.memory_space<vmem>>, %arg8: memref<4x16x128xf32, #tpu.memory_space<vmem>>) attributes {dimension_semantics = [], scalar_prefetch = 0 : i64, scratch_operands = 0 : i64, tpu.core_type = #tpu.core_type<tc>} {
    %c0 = arith.constant 0 : index
    %c0_0 = arith.constant 0 : index
    %0 = vector.load %arg3[%c0, %c0_0] : memref<16x128xf32, #tpu.memory_space<vmem>>, vector<16x128xf32>
    %c0_1 = arith.constant 0 : index
    %c0_2 = arith.constant 0 : index
    %1 = vector.load %arg4[%c0_1, %c0_2] : memref<8x128xf32, #tpu.memory_space<vmem>>, vector<8x128xf32>
    %c0_3 = arith.constant 0 : index
    %c0_4 = arith.constant 0 : index
    %2 = vector.load %arg5[%c0_3, %c0_4] : memref<32x128xf32, #tpu.memory_space<vmem>>, vector<32x128xf32>
    %c0_5 = arith.constant 0 : index
    %c0_6 = arith.constant 0 : index
    %3 = vector.load %arg6[%c0_5, %c0_6] : memref<32x32xf32, #tpu.memory_space<vmem>>, vector<32x32xf32>
    %c0_7 = arith.constant 0 : index
    %c0_8 = arith.constant 0 : index
    %4 = vector.load %arg7[%c0_7, %c0_8] : memref<2x128xf32, #tpu.memory_space<vmem>>, vector<2x128xf32>
    %c0_9 = arith.constant 0 : index
    %c0_10 = arith.constant 0 : index
    %5 = vector.load %arg0[%c0_9, %c0_10] : memref<64x16xf32, #tpu.memory_space<vmem>>, vector<64x16xf32>
    %cst = arith.constant dense<0.000000e+00> : vector<64x128xf32>
    %6 = tpu.matmul %5, %0, %cst {dimension_numbers = #tpu.dot_dimension_numbers<[1], [0], [0], [1], [0, 0, 1, 1], [], []>} : vector<64x16xf32>, vector<16x128xf32>, vector<64x128xf32> -> vector<64x128xf32>
    %7 = vector.extract_strided_slice %4 {offsets = [0, 0], sizes = [1, 128], strides = [1, 1]} : vector<2x128xf32> to vector<1x128xf32>
    %8 = vector.broadcast %7 : vector<1x128xf32> to vector<64x128xf32>
    %9 = arith.addf %6, %8 : vector<64x128xf32>
    %10 = vector.extract_strided_slice %4 {offsets = [1, 0], sizes = [1, 128], strides = [1, 1]} : vector<2x128xf32> to vector<1x128xf32>
    %11 = vector.shape_cast %10 : vector<1x128xf32> to vector<1x128xf32>
    %12 = vector.broadcast %11 : vector<1x128xf32> to vector<16x128xf32>
    %13 = tpu.iota {dimensions = array<i32: 1>} : vector<16x8xi32>
    %c3_i32 = arith.constant 3 : i32
    %14 = vector.broadcast %c3_i32 : i32 to vector<16x8xi32>
    %15 = arith.cmpi slt, %13, %14 : vector<16x8xi32>
    %16 = arith.extui %15 : vector<16x8xi1> to vector<16x8xi32>
    %17 = arith.sitofp %16 : vector<16x8xi32> to vector<16x8xf32>
    %cst_11 = arith.constant 0.000000e+00 : f32
    %18 = vector.broadcast %cst_11 : f32 to vector<16x32xf32>
    %cst_12 = arith.constant 0.000000e+00 : f32
    %19 = vector.broadcast %cst_12 : f32 to vector<16x128xf32>
    %c0_13 = arith.constant 0 : index
    %c0_14 = arith.constant 0 : index
    %c0_15 = arith.constant 0 : index
    %20 = vector.load %arg2[%c0_13, %c0_14, %c0_15] : memref<2x16x8xf32, #tpu.memory_space<vmem>>, vector<1x16x8xf32>
    %21 = vector.shape_cast %20 : vector<1x16x8xf32> to vector<16x8xf32>
    %c1 = arith.constant 1 : index
    %c0_16 = arith.constant 0 : index
    %c0_17 = arith.constant 0 : index
    %22 = vector.load %arg2[%c1, %c0_16, %c0_17] : memref<2x16x8xf32, #tpu.memory_space<vmem>>, vector<1x16x8xf32>
    %23 = vector.shape_cast %22 : vector<1x16x8xf32> to vector<16x8xf32>
    %24 = vector.extract_strided_slice %9 {offsets = [0, 0], sizes = [16, 128], strides = [1, 1]} : vector<64x128xf32> to vector<16x128xf32>
    %cst_18 = arith.constant dense<0.000000e+00> : vector<16x128xf32>
    %25 = tpu.matmul %21, %1, %cst_18 {dimension_numbers = #tpu.dot_dimension_numbers<[1], [0], [0], [1], [0, 0, 1, 1], [], []>} : vector<16x8xf32>, vector<8x128xf32>, vector<16x128xf32> -> vector<16x128xf32>
    %26 = arith.addf %24, %25 : vector<16x128xf32>
    %27 = arith.addf %26, %19 : vector<16x128xf32>
    %28 = vector.extract_strided_slice %27 {offsets = [0, 32], sizes = [16, 32], strides = [1, 1]} : vector<16x128xf32> to vector<16x32xf32>
    %29 = arith.negf %28 : vector<16x32xf32>
    %30 = math.exp %29 : vector<16x32xf32>
    %cst_19 = arith.constant 1.000000e+00 : f32
    %31 = vector.broadcast %cst_19 : f32 to vector<16x32xf32>
    %32 = arith.addf %31, %30 : vector<16x32xf32>
    %33 = arith.divf %31, %32 : vector<16x32xf32>
    %34 = vector.extract_strided_slice %27 {offsets = [0, 64], sizes = [16, 32], strides = [1, 1]} : vector<16x128xf32> to vector<16x32xf32>
    %35 = arith.negf %34 : vector<16x32xf32>
    %36 = math.exp %35 : vector<16x32xf32>
    %cst_20 = arith.constant 1.000000e+00 : f32
    %37 = vector.broadcast %cst_20 : f32 to vector<16x32xf32>
    %38 = arith.addf %37, %36 : vector<16x32xf32>
    %39 = arith.divf %37, %38 : vector<16x32xf32>
    %40 = vector.extract_strided_slice %27 {offsets = [0, 96], sizes = [16, 32], strides = [1, 1]} : vector<16x128xf32> to vector<16x32xf32>
    %41 = arith.mulf %39, %18 : vector<16x32xf32>
    %cst_21 = arith.constant dense<0.000000e+00> : vector<16x32xf32>
    %42 = tpu.matmul %41, %3, %cst_21 {dimension_numbers = #tpu.dot_dimension_numbers<[1], [0], [0], [1], [0, 0, 1, 1], [], []>} : vector<16x32xf32>, vector<32x32xf32>, vector<16x32xf32> -> vector<16x32xf32>
    %43 = arith.addf %40, %42 : vector<16x32xf32>
    %44 = math.tanh %43 : vector<16x32xf32>
    %45 = arith.mulf %33, %18 : vector<16x32xf32>
    %cst_22 = arith.constant 1.000000e+00 : f32
    %46 = vector.broadcast %cst_22 : f32 to vector<16x32xf32>
    %47 = arith.subf %46, %33 : vector<16x32xf32>
    %48 = arith.mulf %47, %44 : vector<16x32xf32>
    %49 = arith.addf %45, %48 : vector<16x32xf32>
    %cst_23 = arith.constant dense<0.000000e+00> : vector<16x128xf32>
    %50 = tpu.matmul %49, %2, %cst_23 {dimension_numbers = #tpu.dot_dimension_numbers<[1], [0], [0], [1], [0, 0, 1, 1], [], []>} : vector<16x32xf32>, vector<32x128xf32>, vector<16x128xf32> -> vector<16x128xf32>
    %51 = arith.addf %50, %12 : vector<16x128xf32>
    %c0_24 = arith.constant 0 : index
    %c0_25 = arith.constant 0 : index
    %c0_26 = arith.constant 0 : index
    %52 = vector.load %arg8[%c0_24, %c0_25, %c0_26] : memref<4x16x128xf32, #tpu.memory_space<vmem>>, vector<1x16x128xf32>
    %53 = vector.shape_cast %52 : vector<1x16x128xf32> to vector<16x128xf32>
    %54 = vector.shape_cast %51 : vector<16x128xf32> to vector<1x16x128xf32>
    tpu.vector_store %arg8[%c0_24, %c0_25, %c0_26], %54 {strides = array<i32>} : memref<4x16x128xf32, #tpu.memory_space<vmem>>, vector<1x16x128xf32>,
    %55 = vector.extract_strided_slice %51 {offsets = [0, 0], sizes = [16, 8], strides = [1, 1]} : vector<16x128xf32> to vector<16x8xf32>
    %56 = arith.mulf %55, %17 : vector<16x8xf32>
    %57 = arith.subf %55, %23 : vector<16x8xf32>
    %c0_27 = arith.constant 0 : index
    %c0_28 = arith.constant 0 : index
    %c0_29 = arith.constant 0 : index
    %58 = vector.load %arg1[%c0_27, %c0_28, %c0_29] : memref<3x16x8xf32, #tpu.memory_space<vmem>>, vector<1x16x8xf32>
    %59 = vector.shape_cast %58 : vector<1x16x8xf32> to vector<16x8xf32>
    %60 = arith.mulf %57, %59 : vector<16x8xf32>
    %61 = arith.addf %56, %60 : vector<16x8xf32>
    %62 = vector.extract_strided_slice %9 {offsets = [16, 0], sizes = [16, 128], strides = [1, 1]} : vector<64x128xf32> to vector<16x128xf32>
    %cst_30 = arith.constant dense<0.000000e+00> : vector<16x128xf32>
    %63 = tpu.matmul %61, %1, %cst_30 {dimension_numbers = #tpu.dot_dimension_numbers<[1], [0], [0], [1], [0, 0, 1, 1], [], []>} : vector<16x8xf32>, vector<8x128xf32>, vector<16x128xf32> -> vector<16x128xf32>
    %64 = arith.addf %62, %63 : vector<16x128xf32>
    %65 = arith.addf %64, %50 : vector<16x128xf32>
    %66 = vector.extract_strided_slice %65 {offsets = [0, 32], sizes = [16, 32], strides = [1, 1]} : vector<16x128xf32> to vector<16x32xf32>
    %67 = arith.negf %66 : vector<16x32xf32>
    %68 = math.exp %67 : vector<16x32xf32>
    %cst_31 = arith.constant 1.000000e+00 : f32
    %69 = vector.broadcast %cst_31 : f32 to vector<16x32xf32>
    %70 = arith.addf %69, %68 : vector<16x32xf32>
    %71 = arith.divf %69, %70 : vector<16x32xf32>
    %72 = vector.extract_strided_slice %65 {offsets = [0, 64], sizes = [16, 32], strides = [1, 1]} : vector<16x128xf32> to vector<16x32xf32>
    %73 = arith.negf %72 : vector<16x32xf32>
    %74 = math.exp %73 : vector<16x32xf32>
    %cst_32 = arith.constant 1.000000e+00 : f32
    %75 = vector.broadcast %cst_32 : f32 to vector<16x32xf32>
    %76 = arith.addf %75, %74 : vector<16x32xf32>
    %77 = arith.divf %75, %76 : vector<16x32xf32>
    %78 = vector.extract_strided_slice %65 {offsets = [0, 96], sizes = [16, 32], strides = [1, 1]} : vector<16x128xf32> to vector<16x32xf32>
    %79 = arith.mulf %77, %49 : vector<16x32xf32>
    %cst_33 = arith.constant dense<0.000000e+00> : vector<16x32xf32>
    %80 = tpu.matmul %79, %3, %cst_33 {dimension_numbers = #tpu.dot_dimension_numbers<[1], [0], [0], [1], [0, 0, 1, 1], [], []>} : vector<16x32xf32>, vector<32x32xf32>, vector<16x32xf32> -> vector<16x32xf32>
    %81 = arith.addf %78, %80 : vector<16x32xf32>
    %82 = math.tanh %81 : vector<16x32xf32>
    %83 = arith.mulf %71, %49 : vector<16x32xf32>
    %cst_34 = arith.constant 1.000000e+00 : f32
    %84 = vector.broadcast %cst_34 : f32 to vector<16x32xf32>
    %85 = arith.subf %84, %71 : vector<16x32xf32>
    %86 = arith.mulf %85, %82 : vector<16x32xf32>
    %87 = arith.addf %83, %86 : vector<16x32xf32>
    %cst_35 = arith.constant dense<0.000000e+00> : vector<16x128xf32>
    %88 = tpu.matmul %87, %2, %cst_35 {dimension_numbers = #tpu.dot_dimension_numbers<[1], [0], [0], [1], [0, 0, 1, 1], [], []>} : vector<16x32xf32>, vector<32x128xf32>, vector<16x128xf32> -> vector<16x128xf32>
    %89 = arith.addf %88, %12 : vector<16x128xf32>
    %c1_36 = arith.constant 1 : index
    %c0_37 = arith.constant 0 : index
    %c0_38 = arith.constant 0 : index
    %90 = vector.load %arg8[%c1_36, %c0_37, %c0_38] : memref<4x16x128xf32, #tpu.memory_space<vmem>>, vector<1x16x128xf32>
    %91 = vector.shape_cast %90 : vector<1x16x128xf32> to vector<16x128xf32>
    %92 = vector.shape_cast %89 : vector<16x128xf32> to vector<1x16x128xf32>
    tpu.vector_store %arg8[%c1_36, %c0_37, %c0_38], %92 {strides = array<i32>} : memref<4x16x128xf32, #tpu.memory_space<vmem>>, vector<1x16x128xf32>,
    %93 = vector.extract_strided_slice %89 {offsets = [0, 0], sizes = [16, 8], strides = [1, 1]} : vector<16x128xf32> to vector<16x8xf32>
    %94 = arith.mulf %93, %17 : vector<16x8xf32>
    %95 = arith.subf %93, %55 : vector<16x8xf32>
    %c1_39 = arith.constant 1 : index
    %c0_40 = arith.constant 0 : index
    %c0_41 = arith.constant 0 : index
    %96 = vector.load %arg1[%c1_39, %c0_40, %c0_41] : memref<3x16x8xf32, #tpu.memory_space<vmem>>, vector<1x16x8xf32>
    %97 = vector.shape_cast %96 : vector<1x16x8xf32> to vector<16x8xf32>
    %98 = arith.mulf %95, %97 : vector<16x8xf32>
    %99 = arith.addf %94, %98 : vector<16x8xf32>
    %100 = vector.extract_strided_slice %9 {offsets = [32, 0], sizes = [16, 128], strides = [1, 1]} : vector<64x128xf32> to vector<16x128xf32>
    %cst_42 = arith.constant dense<0.000000e+00> : vector<16x128xf32>
    %101 = tpu.matmul %99, %1, %cst_42 {dimension_numbers = #tpu.dot_dimension_numbers<[1], [0], [0], [1], [0, 0, 1, 1], [], []>} : vector<16x8xf32>, vector<8x128xf32>, vector<16x128xf32> -> vector<16x128xf32>
    %102 = arith.addf %100, %101 : vector<16x128xf32>
    %103 = arith.addf %102, %88 : vector<16x128xf32>
    %104 = vector.extract_strided_slice %103 {offsets = [0, 32], sizes = [16, 32], strides = [1, 1]} : vector<16x128xf32> to vector<16x32xf32>
    %105 = arith.negf %104 : vector<16x32xf32>
    %106 = math.exp %105 : vector<16x32xf32>
    %cst_43 = arith.constant 1.000000e+00 : f32
    %107 = vector.broadcast %cst_43 : f32 to vector<16x32xf32>
    %108 = arith.addf %107, %106 : vector<16x32xf32>
    %109 = arith.divf %107, %108 : vector<16x32xf32>
    %110 = vector.extract_strided_slice %103 {offsets = [0, 64], sizes = [16, 32], strides = [1, 1]} : vector<16x128xf32> to vector<16x32xf32>
    %111 = arith.negf %110 : vector<16x32xf32>
    %112 = math.exp %111 : vector<16x32xf32>
    %cst_44 = arith.constant 1.000000e+00 : f32
    %113 = vector.broadcast %cst_44 : f32 to vector<16x32xf32>
    %114 = arith.addf %113, %112 : vector<16x32xf32>
    %115 = arith.divf %113, %114 : vector<16x32xf32>
    %116 = vector.extract_strided_slice %103 {offsets = [0, 96], sizes = [16, 32], strides = [1, 1]} : vector<16x128xf32> to vector<16x32xf32>
    %117 = arith.mulf %115, %87 : vector<16x32xf32>
    %cst_45 = arith.constant dense<0.000000e+00> : vector<16x32xf32>
    %118 = tpu.matmul %117, %3, %cst_45 {dimension_numbers = #tpu.dot_dimension_numbers<[1], [0], [0], [1], [0, 0, 1, 1], [], []>} : vector<16x32xf32>, vector<32x32xf32>, vector<16x32xf32> -> vector<16x32xf32>
    %119 = arith.addf %116, %118 : vector<16x32xf32>
    %120 = math.tanh %119 : vector<16x32xf32>
    %121 = arith.mulf %109, %87 : vector<16x32xf32>
    %cst_46 = arith.constant 1.000000e+00 : f32
    %122 = vector.broadcast %cst_46 : f32 to vector<16x32xf32>
    %123 = arith.subf %122, %109 : vector<16x32xf32>
    %124 = arith.mulf %123, %120 : vector<16x32xf32>
    %125 = arith.addf %121, %124 : vector<16x32xf32>
    %cst_47 = arith.constant dense<0.000000e+00> : vector<16x128xf32>
    %126 = tpu.matmul %125, %2, %cst_47 {dimension_numbers = #tpu.dot_dimension_numbers<[1], [0], [0], [1], [0, 0, 1, 1], [], []>} : vector<16x32xf32>, vector<32x128xf32>, vector<16x128xf32> -> vector<16x128xf32>
    %127 = arith.addf %126, %12 : vector<16x128xf32>
    %c2 = arith.constant 2 : index
    %c0_48 = arith.constant 0 : index
    %c0_49 = arith.constant 0 : index
    %128 = vector.load %arg8[%c2, %c0_48, %c0_49] : memref<4x16x128xf32, #tpu.memory_space<vmem>>, vector<1x16x128xf32>
    %129 = vector.shape_cast %128 : vector<1x16x128xf32> to vector<16x128xf32>
    %130 = vector.shape_cast %127 : vector<16x128xf32> to vector<1x16x128xf32>
    tpu.vector_store %arg8[%c2, %c0_48, %c0_49], %130 {strides = array<i32>} : memref<4x16x128xf32, #tpu.memory_space<vmem>>, vector<1x16x128xf32>,
    %131 = vector.extract_strided_slice %127 {offsets = [0, 0], sizes = [16, 8], strides = [1, 1]} : vector<16x128xf32> to vector<16x8xf32>
    %132 = arith.mulf %131, %17 : vector<16x8xf32>
    %133 = arith.subf %131, %93 : vector<16x8xf32>
    %c2_50 = arith.constant 2 : index
    %c0_51 = arith.constant 0 : index
    %c0_52 = arith.constant 0 : index
    %134 = vector.load %arg1[%c2_50, %c0_51, %c0_52] : memref<3x16x8xf32, #tpu.memory_space<vmem>>, vector<1x16x8xf32>
    %135 = vector.shape_cast %134 : vector<1x16x8xf32> to vector<16x8xf32>
    %136 = arith.mulf %133, %135 : vector<16x8xf32>
    %137 = arith.addf %132, %136 : vector<16x8xf32>
    %138 = vector.extract_strided_slice %9 {offsets = [48, 0], sizes = [16, 128], strides = [1, 1]} : vector<64x128xf32> to vector<16x128xf32>
    %cst_53 = arith.constant dense<0.000000e+00> : vector<16x128xf32>
    %139 = tpu.matmul %137, %1, %cst_53 {dimension_numbers = #tpu.dot_dimension_numbers<[1], [0], [0], [1], [0, 0, 1, 1], [], []>} : vector<16x8xf32>, vector<8x128xf32>, vector<16x128xf32> -> vector<16x128xf32>
    %140 = arith.addf %138, %139 : vector<16x128xf32>
    %141 = arith.addf %140, %126 : vector<16x128xf32>
    %142 = vector.extract_strided_slice %141 {offsets = [0, 32], sizes = [16, 32], strides = [1, 1]} : vector<16x128xf32> to vector<16x32xf32>
    %143 = arith.negf %142 : vector<16x32xf32>
    %144 = math.exp %143 : vector<16x32xf32>
    %cst_54 = arith.constant 1.000000e+00 : f32
    %145 = vector.broadcast %cst_54 : f32 to vector<16x32xf32>
    %146 = arith.addf %145, %144 : vector<16x32xf32>
    %147 = arith.divf %145, %146 : vector<16x32xf32>
    %148 = vector.extract_strided_slice %141 {offsets = [0, 64], sizes = [16, 32], strides = [1, 1]} : vector<16x128xf32> to vector<16x32xf32>
    %149 = arith.negf %148 : vector<16x32xf32>
    %150 = math.exp %149 : vector<16x32xf32>
    %cst_55 = arith.constant 1.000000e+00 : f32
    %151 = vector.broadcast %cst_55 : f32 to vector<16x32xf32>
    %152 = arith.addf %151, %150 : vector<16x32xf32>
    %153 = arith.divf %151, %152 : vector<16x32xf32>
    %154 = vector.extract_strided_slice %141 {offsets = [0, 96], sizes = [16, 32], strides = [1, 1]} : vector<16x128xf32> to vector<16x32xf32>
    %155 = arith.mulf %153, %125 : vector<16x32xf32>
    %cst_56 = arith.constant dense<0.000000e+00> : vector<16x32xf32>
    %156 = tpu.matmul %155, %3, %cst_56 {dimension_numbers = #tpu.dot_dimension_numbers<[1], [0], [0], [1], [0, 0, 1, 1], [], []>} : vector<16x32xf32>, vector<32x32xf32>, vector<16x32xf32> -> vector<16x32xf32>
    %157 = arith.addf %154, %156 : vector<16x32xf32>
    %158 = math.tanh %157 : vector<16x32xf32>
    %159 = arith.mulf %147, %125 : vector<16x32xf32>
    %cst_57 = arith.constant 1.000000e+00 : f32
    %160 = vector.broadcast %cst_57 : f32 to vector<16x32xf32>
    %161 = arith.subf %160, %147 : vector<16x32xf32>
    %162 = arith.mulf %161, %158 : vector<16x32xf32>
    %163 = arith.addf %159, %162 : vector<16x32xf32>
    %cst_58 = arith.constant dense<0.000000e+00> : vector<16x128xf32>
    %164 = tpu.matmul %163, %2, %cst_58 {dimension_numbers = #tpu.dot_dimension_numbers<[1], [0], [0], [1], [0, 0, 1, 1], [], []>} : vector<16x32xf32>, vector<32x128xf32>, vector<16x128xf32> -> vector<16x128xf32>
    %165 = arith.addf %164, %12 : vector<16x128xf32>
    %c3 = arith.constant 3 : index
    %c0_59 = arith.constant 0 : index
    %c0_60 = arith.constant 0 : index
    %166 = vector.load %arg8[%c3, %c0_59, %c0_60] : memref<4x16x128xf32, #tpu.memory_space<vmem>>, vector<1x16x128xf32>
    %167 = vector.shape_cast %166 : vector<1x16x128xf32> to vector<16x128xf32>
    %168 = vector.shape_cast %165 : vector<16x128xf32> to vector<1x16x128xf32>
    tpu.vector_store %arg8[%c3, %c0_59, %c0_60], %168 {strides = array<i32>} : memref<4x16x128xf32, #tpu.memory_space<vmem>>, vector<1x16x128xf32>,
    return
  }
}

</mosaic_0001>

<llo_original>
// kernel: autoreg_u_forward.1
$region0: #{autoreg_u_forward.1}
  #allocation0 [shape = 'u32[]', space=smem, size = 0x4, offset = 0x4, fixed_abs, tag = 'smem constant byte address 0x4 - core index']
  #allocation1 [shape = 'u32[144,128]{1,0:T(1,128)}', space=vmem, size = 0x12000, scoped, tag = 'internal scratch']
  %s0 = inlined_call_operand.vmem [shape: f32[64,16], index: 0, kind: input, shape index: {}]
  %s1 = inlined_call_operand.vmem [shape: f32[3,16,8], index: 1, kind: input, shape index: {}]
  %s2 = inlined_call_operand.vmem [shape: f32[2,16,8], index: 2, kind: input, shape index: {}]
  %s3 = inlined_call_operand.vmem [shape: f32[16,128], index: 3, kind: input, shape index: {}]
  %s4 = inlined_call_operand.vmem [shape: f32[8,128], index: 4, kind: input, shape index: {}]
  %s5 = inlined_call_operand.vmem [shape: f32[32,128], index: 5, kind: input, shape index: {}]
  %s6 = inlined_call_operand.vmem [shape: f32[32,32], index: 6, kind: input, shape index: {}]
  %s7 = inlined_call_operand.vmem [shape: f32[2,128], index: 7, kind: input, shape index: {}]
  %s8 = inlined_call_operand.vmem [shape: f32[4,16,128], index: 8, kind: output, shape index: {}]
  %s9 = sld [smem:[#allocation0]]
  $region42: #{autoreg_u_forward.1} parent=0
    _
  %s11 = ssub.s32 1, %s9
  %s12 = scalar_select 0, %s11, %s9
  // Predicated region
  $region2: #{autoreg_u_forward.1} parent=0 // pred_check
    _
  $region3: #{autoreg_u_forward.1} parent=0 // pred_check_branch
    %14 = sbr.rel (0) target = $region5
  $region4: #{autoreg_u_forward.1} parent=0 // pred_region
    _
  $region5: #{autoreg_u_forward.1} parent=0 // pred_fallthru
    _
  // Predicated region
  $region6: #{autoreg_u_forward.1} parent=0 // pred_check
    _
  $region7: #{autoreg_u_forward.1} parent=0 // pred_check_branch
    %16 = sbr.rel (0) target = $region9
  $region8: #{autoreg_u_forward.1} parent=0 // pred_region
    _
  $region9: #{autoreg_u_forward.1} parent=0 // pred_fallthru
    _
  // Predicated region
  $region10: #{autoreg_u_forward.1} parent=0 // pred_check
    _
  $region11: #{autoreg_u_forward.1} parent=0 // pred_check_branch
    %18 = sbr.rel (0) target = $region13
  $region12: #{autoreg_u_forward.1} parent=0 // pred_region
    _
  $region13: #{autoreg_u_forward.1} parent=0 // pred_fallthru
    _
  // Predicated region
  $region14: #{autoreg_u_forward.1} parent=0 // pred_check
    _
  $region15: #{autoreg_u_forward.1} parent=0 // pred_check_branch
    %20 = sbr.rel (0) target = $region17
  $region16: #{autoreg_u_forward.1} parent=0 // pred_region
    _
  $region17: #{autoreg_u_forward.1} parent=0 // pred_fallthru
    _
  // Predicated region
  $region18: #{autoreg_u_forward.1} parent=0 // pred_check
    _
  $region19: #{autoreg_u_forward.1} parent=0 // pred_check_branch
    %22 = sbr.rel (0) target = $region21
  $region20: #{autoreg_u_forward.1} parent=0 // pred_region
    _
  $region21: #{autoreg_u_forward.1} parent=0 // pred_fallthru
    _
  // Predicated region
  $region22: #{autoreg_u_forward.1} parent=0 // pred_check
    _
  $region23: #{autoreg_u_forward.1} parent=0 // pred_check_branch
    %24 = sbr.rel (0) target = $region25
  $region24: #{autoreg_u_forward.1} parent=0 // pred_region
    _
  $region25: #{autoreg_u_forward.1} parent=0 // pred_fallthru
    _
  // Predicated region
  $region26: #{autoreg_u_forward.1} parent=0 // pred_check
    _
  $region27: #{autoreg_u_forward.1} parent=0 // pred_check_branch
    %26 = sbr.rel (0) target = $region29
  $region28: #{autoreg_u_forward.1} parent=0 // pred_region
    _
  $region29: #{autoreg_u_forward.1} parent=0 // pred_fallthru
    _
  // Predicated region
  $region30: #{autoreg_u_forward.1} parent=0 // pred_check
    _
  $region31: #{autoreg_u_forward.1} parent=0 // pred_check_branch
    %28 = sbr.rel (0) target = $region33
  $region32: #{autoreg_u_forward.1} parent=0 // pred_region
    _
  $region33: #{autoreg_u_forward.1} parent=0 // pred_fallthru
    _
  %v29 = vld [vmem:[%s3] sm:$0xff]
  %v30 = vld [vmem:[%s3 + $0x8] sm:$0xff]
  %v31 = vld [vmem:[%s4] sm:$0xff]
  %v32 = vld [vmem:[%s5] sm:$0xff]
  %v33 = vld [vmem:[%s5 + $0x8] sm:$0xff]
  %v34 = vld [vmem:[%s5 + $0x10] sm:$0xff]
  %v35 = vld [vmem:[%s5 + $0x18] sm:$0xff]
  %v36 = vld [vmem:[%s6] sm:$0xff]
  %v37 = vld [vmem:[%s6 + $0x8] sm:$0xff]
  %v38 = vld [vmem:[%s6 + $0x10] sm:$0xff]
  %v39 = vld [vmem:[%s6 + $0x18] sm:$0xff]
  %v40 = vld [vmem:[%s7] sm:$0x3]
  %v41 = vld [vmem:[%s0] sm:$0xff]
  %v42 = vld [vmem:[%s0 + $0x8] sm:$0xff]
  %v43 = vld [vmem:[%s0 + $0x10] sm:$0xff]
  %v44 = vld [vmem:[%s0 + $0x18] sm:$0xff]
  %v45 = vld [vmem:[%s0 + $0x20] sm:$0xff]
  %v46 = vld [vmem:[%s0 + $0x28] sm:$0xff]
  %v47 = vld [vmem:[%s0 + $0x30] sm:$0xff]
  %v48 = vld [vmem:[%s0 + $0x38] sm:$0xff]
  %v49 = vlaneseq
  %v50 = vshrl.u32 %v49, 7
  %v51 = vsub.s32 0, %v50
  %v52 = vrot.slane %v40, %v51
  %vm53 = vcmask 130048
  %v55 = vsel %vm53, %v41, 0
  %v58 = vsel %vm53, %v42, 0
  %v61 = vsel %vm53, %v43, 0
  %v64 = vsel %vm53, %v44, 0
  %v67 = vsel %vm53, %v45, 0
  %v70 = vsel %vm53, %v46, 0
  %v73 = vsel %vm53, %v47, 0
  %v76 = vsel %vm53, %v48, 0
  %78 = vmatprep.subr.mxu0 0.0
  %79 = vmatpush1.msra.mxu0 %v29
  %80 = vmatprep.subr.mxu0 0.0
  %81 = vmatpush1.msra.mxu0 %v30
  %82 = vmatprep.subr.mxu0 0.0
  %83 = vmatpush1.msra.mxu0 0.0
  %84 = vmatprep.subr.mxu0 0.0
  %85 = vmatpush1.msra.mxu0 0.0
  %86 = vmatprep.subr.mxu0 0.0
  %87 = vmatpush1.msra.mxu0 0.0
  %88 = vmatprep.subr.mxu0 0.0
  %89 = vmatpush1.msra.mxu0 0.0
  %90 = vmatprep.subr.mxu0 0.0
  %91 = vmatpush1.msra.mxu0 0.0
  %92 = vmatprep.subr.mxu0 0.0
  %93 = vmatpush1.msra.mxu0 0.0
  %94 = vmatprep.subr.mxu0 0.0
  %95 = vmatpush1.msra.mxu0 0.0
  %96 = vmatprep.subr.mxu0 0.0
  %97 = vmatpush1.msra.mxu0 0.0
  %98 = vmatprep.subr.mxu0 0.0
  %99 = vmatpush1.msra.mxu0 0.0
  %100 = vmatprep.subr.mxu0 0.0
  %101 = vmatpush1.msra.mxu0 0.0
  %102 = vmatprep.subr.mxu0 0.0
  %103 = vmatpush1.msra.mxu0 0.0
  %104 = vmatprep.subr.mxu0 0.0
  %105 = vmatpush1.msra.mxu0 0.0
  %106 = vmatprep.subr.mxu0 0.0
  %107 = vmatpush1.msra.mxu0 0.0
  %108 = vmatprep.subr.mxu0 0.0
  %109 = vmatpush1.msra.mxu0 0.0
  %110 = vmatprep.subr.mxu0 0.0
  %111 = vmatpush1.msra.mxu0 0.0
  %112 = vmatprep.subr.mxu0 0.0
  %113 = vmatpush1.msra.mxu0 0.0
  %114 = vmatprep.subr.mxu0 0.0
  %115 = vmatpush1.msra.mxu0 0.0
  %116 = vmatprep.subr.mxu0 0.0
  %117 = vmatpush1.msra.mxu0 0.0
  %118 = vmatprep.subr.mxu0 0.0
  %119 = vmatpush1.msra.mxu0 0.0
  %120 = vmatprep.subr.mxu0 0.0
  %121 = vmatpush1.msra.mxu0 0.0
  %122 = vmatprep.subr.mxu0 0.0
  %123 = vmatpush1.msra.mxu0 0.0
  %124 = vmatprep.subr.mxu0 0.0
  %125 = vmatpush1.msra.mxu0 0.0
  %126 = vmatprep.subr.mxu0 0.0
  %127 = vmatpush1.msra.mxu0 0.0
  %128 = vmatprep.subr.mxu0 0.0
  %129 = vmatpush1.msra.mxu0 0.0
  %130 = vmatprep.subr.mxu0 0.0
  %131 = vmatpush1.msra.mxu0 0.0
  %132 = vmatprep.subr.mxu0 0.0
  %133 = vmatpush1.msra.mxu0 0.0
  %134 = vmatprep.subr.mxu0 0.0
  %135 = vmatpush1.msra.mxu0 0.0
  %136 = vmatprep.subr.mxu0 0.0
  %137 = vmatpush1.msra.mxu0 0.0
  %138 = vmatprep.subr.mxu0 0.0
  %139 = vmatpush1.msra.mxu0 0.0
  %140 = vmatprep.subr.mxu0 0.0
  %141 = vmatpush1.msra.mxu0 0.0
  %142 = vmatprep.mubr.f32.mxu0 0.0
  %143 = vmatmul.mubr.f32.gmra.mrb[0].mxu0 %v55
  %v144 = vpop.f32.mrb[0].mxu0
  %v145 = vadd.f32 %v52, %v144
  %v146 = vpop.f32.mrb[0].mxu0
  %147 = vmatprep.mubr.f32.mxu0 0.0
  %148 = vmatmul.mubr.f32.gmra.mrb[0].mxu0 %v58
  %v149 = vpop.f32.mrb[0].mxu0
  %v150 = vadd.f32 %v52, %v149
  %v151 = vpop.f32.mrb[0].mxu0
  %152 = vmatprep.mubr.f32.mxu0 0.0
  %153 = vmatmul.mubr.f32.gmra.mrb[0].mxu0 %v61
  %v154 = vpop.f32.mrb[0].mxu0
  %v155 = vadd.f32 %v52, %v154
  %v156 = vpop.f32.mrb[0].mxu0
  %157 = vmatprep.mubr.f32.mxu0 0.0
  %158 = vmatmul.mubr.f32.gmra.mrb[0].mxu0 %v64
  %v159 = vpop.f32.mrb[0].mxu0
  %v160 = vadd.f32 %v52, %v159
  %v161 = vpop.f32.mrb[0].mxu0
  %162 = vmatprep.mubr.f32.mxu0 0.0
  %163 = vmatmul.mubr.f32.gmra.mrb[0].mxu0 %v67
  %v164 = vpop.f32.mrb[0].mxu0
  %v165 = vadd.f32 %v52, %v164
  %v166 = vpop.f32.mrb[0].mxu0
  %167 = vmatprep.mubr.f32.mxu0 0.0
  %168 = vmatmul.mubr.f32.gmra.mrb[0].mxu0 %v70
  %v169 = vpop.f32.mrb[0].mxu0
  %v170 = vadd.f32 %v52, %v169
  %v171 = vpop.f32.mrb[0].mxu0
  %172 = vmatprep.mubr.f32.mxu0 0.0
  %173 = vmatmul.mubr.f32.gmra.mrb[0].mxu0 %v73
  %v174 = vpop.f32.mrb[0].mxu0
  %v175 = vadd.f32 %v52, %v174
  %v176 = vpop.f32.mrb[0].mxu0
  %177 = vmatprep.mubr.f32.mxu0 0.0
  %178 = vmatmul.mubr.f32.gmra.mrb[0].mxu0 %v76
  %v179 = vpop.f32.mrb[0].mxu0
  %v180 = vadd.f32 %v52, %v179
  %v181 = vpop.f32.mrb[0].mxu0
  %182 = vdwg.mxu0
  %v183 = vlaneseq
  %v184 = vshrl.u32 %v183, 7
  %v185 = vsub.s32 1, %v184
  %v186 = vrot.slane %v40, %v185
  %v187 = vlaneseq
  %v188 = vand.u32 %v187, 127
  %vm189 = vcmp.lt.s32.totalorder %v188, 3
  %v190 = vsel %vm189, 1, 0
  %v191 = vcvt.s32.f32 %v190
  %v192 = vld [vmem:[%s2] sm:$0xff]
  %v193 = vld [vmem:[%s2 + $0x8] sm:$0xff]
  %s194 = scalar_lea.vmem %s2, 16
  %v195 = vld [vmem:[%s194] sm:$0xff]
  %v196 = vld [vmem:[%s194 + $0x8] sm:$0xff]
  %vm197 = vcmask 64512
  %v199 = vsel %vm197, %v192, 0
  %v202 = vsel %vm197, %v193, 0
  %204 = vmatprep.subr.mxu0 0.0
  %205 = vmatpush1.msra.mxu0 %v31
  %206 = vmatprep.subr.mxu0 0.0
  %207 = vmatpush1.msra.mxu0 0.0
  %208 = vmatprep.subr.mxu0 0.0
  %209 = vmatpush1.msra.mxu0 0.0
  %210 = vmatprep.subr.mxu0 0.0
  %211 = vmatpush1.msra.mxu0 0.0
  %212 = vmatprep.subr.mxu0 0.0
  %213 = vmatpush1.msra.mxu0 0.0
  %214 = vmatprep.subr.mxu0 0.0
  %215 = vmatpush1.msra.mxu0 0.0
  %216 = vmatprep.subr.mxu0 0.0
  %217 = vmatpush1.msra.mxu0 0.0
  %218 = vmatprep.subr.mxu0 0.0
  %219 = vmatpush1.msra.mxu0 0.0
  %220 = vmatprep.subr.mxu0 0.0
  %221 = vmatpush1.msra.mxu0 0.0
  %222 = vmatprep.subr.mxu0 0.0
  %223 = vmatpush1.msra.mxu0 0.0
  %224 = vmatprep.subr.mxu0 0.0
  %225 = vmatpush1.msra.mxu0 0.0
  %226 = vmatprep.subr.mxu0 0.0
  %227 = vmatpush1.msra.mxu0 0.0
  %228 = vmatprep.subr.mxu0 0.0
  %229 = vmatpush1.msra.mxu0 0.0
  %230 = vmatprep.subr.mxu0 0.0
  %231 = vmatpush1.msra.mxu0 0.0
  %232 = vmatprep.subr.mxu0 0.0
  %233 = vmatpush1.msra.mxu0 0.0
  %234 = vmatprep.subr.mxu0 0.0
  %235 = vmatpush1.msra.mxu0 0.0
  %236 = vmatprep.subr.mxu0 0.0
  %237 = vmatpush1.msra.mxu0 0.0
  %238 = vmatprep.subr.mxu0 0.0
  %239 = vmatpush1.msra.mxu0 0.0
  %240 = vmatprep.subr.mxu0 0.0
  %241 = vmatpush1.msra.mxu0 0.0
  %242 = vmatprep.subr.mxu0 0.0
  %243 = vmatpush1.msra.mxu0 0.0
  %244 = vmatprep.subr.mxu0 0.0
  %245 = vmatpush1.msra.mxu0 0.0
  %246 = vmatprep.subr.mxu0 0.0
  %247 = vmatpush1.msra.mxu0 0.0
  %248 = vmatprep.subr.mxu0 0.0
  %249 = vmatpush1.msra.mxu0 0.0
  %250 = vmatprep.subr.mxu0 0.0
  %251 = vmatpush1.msra.mxu0 0.0
  %252 = vmatprep.subr.mxu0 0.0
  %253 = vmatpush1.msra.mxu0 0.0
  %254 = vmatprep.subr.mxu0 0.0
  %255 = vmatpush1.msra.mxu0 0.0
  %256 = vmatprep.subr.mxu0 0.0
  %257 = vmatpush1.msra.mxu0 0.0
  %258 = vmatprep.subr.mxu0 0.0
  %259 = vmatpush1.msra.mxu0 0.0
  %260 = vmatprep.subr.mxu0 0.0
  %261 = vmatpush1.msra.mxu0 0.0
  %262 = vmatprep.subr.mxu0 0.0
  %263 = vmatpush1.msra.mxu0 0.0
  %264 = vmatprep.subr.mxu0 0.0
  %265 = vmatpush1.msra.mxu0 0.0
  %266 = vmatprep.subr.mxu0 0.0
  %267 = vmatpush1.msra.mxu0 0.0
  %268 = vmatprep.mubr.f32.mxu0 0.0
  %269 = vmatmul.mubr.f32.gmra.mrb[0].mxu0 %v199
  %v270 = vpop.f32.mrb[0].mxu0
  %v271 = vadd.f32 0.0, %v270
  %v272 = vpop.f32.mrb[0].mxu0
  %273 = vmatprep.mubr.f32.mxu0 0.0
  %274 = vmatmul.mubr.f32.gmra.mrb[0].mxu0 %v202
  %v275 = vpop.f32.mrb[0].mxu0
  %v276 = vadd.f32 0.0, %v275
  %v277 = vpop.f32.mrb[0].mxu0
  %278 = vdwg.mxu0
  %v279 = vadd.f32 %v145, %v271
  %v280 = vadd.f32 %v150, %v276
  %v281 = vadd.f32 %v279, 0.0
  %v282 = vadd.f32 %v280, 0.0
  %v283 = vxor.u32 %v281, 2147483648
  %v284 = vxor.u32 %v282, 2147483648
  %v285 = vmul.f32 %v283, 1.442695
  %v286 = vpow.pop %v285
  %v287 = vmul.f32 %v284, 1.442695
  %v288 = vpow.pop %v287
  %v289 = vadd.f32 %v286, 1.0
  %v290 = vadd.f32 %v288, 1.0
  %v291 = vrcp.pop %v289
  %v292 = vmul.f32 1.0, %v291
  %v293 = vrcp.pop %v290
  %v294 = vmul.f32 1.0, %v293
  %v295 = vmul.f32 %v292, 0.0
  %v296 = vmul.f32 %v294, 0.0
  %299 = vrot.lane.b32.xlu0 %v295, 64
  %v300 = vpop.permute.xlu0 %299
  %301 = vrot.lane.b32.xlu0 %v296, 64
  %v302 = vpop.permute.xlu0 %301
  %vm303 = vcmask 261120
  %v304 = vsel %vm303, %v300, 0
  %v306 = vsel %vm303, %v302, 0
  %308 = vmatprep.subr.mxu0 0.0
  %309 = vmatpush1.msra.mxu0 %v36
  %310 = vmatprep.subr.mxu0 0.0
  %311 = vmatpush1.msra.mxu0 %v37
  %312 = vmatprep.subr.mxu0 0.0
  %313 = vmatpush1.msra.mxu0 %v38
  %314 = vmatprep.subr.mxu0 0.0
  %315 = vmatpush1.msra.mxu0 %v39
  %316 = vmatprep.subr.mxu0 0.0
  %317 = vmatpush1.msra.mxu0 0.0
  %318 = vmatprep.subr.mxu0 0.0
  %319 = vmatpush1.msra.mxu0 0.0
  %320 = vmatprep.subr.mxu0 0.0
  %321 = vmatpush1.msra.mxu0 0.0
  %322 = vmatprep.subr.mxu0 0.0
  %323 = vmatpush1.msra.mxu0 0.0
  %324 = vmatprep.subr.mxu0 0.0
  %325 = vmatpush1.msra.mxu0 0.0
  %326 = vmatprep.subr.mxu0 0.0
  %327 = vmatpush1.msra.mxu0 0.0
  %328 = vmatprep.subr.mxu0 0.0
  %329 = vmatpush1.msra.mxu0 0.0
  %330 = vmatprep.subr.mxu0 0.0
  %331 = vmatpush1.msra.mxu0 0.0
  %332 = vmatprep.subr.mxu0 0.0
  %333 = vmatpush1.msra.mxu0 0.0
  %334 = vmatprep.subr.mxu0 0.0
  %335 = vmatpush1.msra.mxu0 0.0
  %336 = vmatprep.subr.mxu0 0.0
  %337 = vmatpush1.msra.mxu0 0.0
  %338 = vmatprep.subr.mxu0 0.0
  %339 = vmatpush1.msra.mxu0 0.0
  %340 = vmatprep.subr.mxu0 0.0
  %341 = vmatpush1.msra.mxu0 0.0
  %342 = vmatprep.subr.mxu0 0.0
  %343 = vmatpush1.msra.mxu0 0.0
  %344 = vmatprep.subr.mxu0 0.0
  %345 = vmatpush1.msra.mxu0 0.0
  %346 = vmatprep.subr.mxu0 0.0
  %347 = vmatpush1.msra.mxu0 0.0
  %348 = vmatprep.subr.mxu0 0.0
  %349 = vmatpush1.msra.mxu0 0.0
  %350 = vmatprep.subr.mxu0 0.0
  %351 = vmatpush1.msra.mxu0 0.0
  %352 = vmatprep.subr.mxu0 0.0
  %353 = vmatpush1.msra.mxu0 0.0
  %354 = vmatprep.subr.mxu0 0.0
  %355 = vmatpush1.msra.mxu0 0.0
  %356 = vmatprep.subr.mxu0 0.0
  %357 = vmatpush1.msra.mxu0 0.0
  %358 = vmatprep.subr.mxu0 0.0
  %359 = vmatpush1.msra.mxu0 0.0
  %360 = vmatprep.subr.mxu0 0.0
  %361 = vmatpush1.msra.mxu0 0.0
  %362 = vmatprep.subr.mxu0 0.0
  %363 = vmatpush1.msra.mxu0 0.0
  %364 = vmatprep.subr.mxu0 0.0
  %365 = vmatpush1.msra.mxu0 0.0
  %366 = vmatprep.subr.mxu0 0.0
  %367 = vmatpush1.msra.mxu0 0.0
  %368 = vmatprep.subr.mxu0 0.0
  %369 = vmatpush1.msra.mxu0 0.0
  %370 = vmatprep.subr.mxu0 0.0
  %371 = vmatpush1.msra.mxu0 0.0
  %372 = vmatprep.mubr.f32.mxu0 0.0
  %373 = vmatmul.mubr.f32.gmra.mrb[0].mxu0 %v304
  %v374 = vpop.f32.mrb[0].mxu0
  %v375 = vadd.f32 0.0, %v374
  %v376 = vpop.f32.mrb[0].mxu0
  %377 = vmatprep.mubr.f32.mxu0 0.0
  %378 = vmatmul.mubr.f32.gmra.mrb[0].mxu0 %v306
  %v379 = vpop.f32.mrb[0].mxu0
  %v380 = vadd.f32 0.0, %v379
  %v381 = vpop.f32.mrb[0].mxu0
  %382 = vdwg.mxu0
  %385 = vrot.lane.b32.xlu0 %v375, 96
  %v386 = vpop.permute.xlu0 %385
  %387 = vrot.lane.b32.xlu0 %v380, 96
  %v388 = vpop.permute.xlu0 %387
  %v391 = vadd.f32 %v281, %v386
  %v392 = vadd.f32 %v282, %v388
  %v393 = vtanh.pop %v391
  %v394 = vtanh.pop %v392
  %v395 = vsub.f32 1.0, %v292
  %v396 = vsub.f32 1.0, %v294
  %399 = vrot.lane.b32.xlu0 %v393, 64
  %v400 = vpop.permute.xlu0 %399
  %401 = vrot.lane.b32.xlu0 %v394, 64
  %v402 = vpop.permute.xlu0 %401
  %v405 = vmul.f32 %v395, %v400
  %v406 = vmul.f32 %v396, %v402
  %v407 = vadd.f32 %v295, %v405
  %v408 = vadd.f32 %v296, %v406
  %411 = vrot.lane.b32.xlu0 %v407, 96
  %v412 = vpop.permute.xlu0 %411
  %413 = vrot.lane.b32.xlu0 %v408, 96
  %v414 = vpop.permute.xlu0 %413
  %v415 = vsel %vm303, %v412, 0
  %v417 = vsel %vm303, %v414, 0
  %419 = vmatprep.subr.mxu0 0.0
  %420 = vmatpush1.msra.mxu0 %v32
  %421 = vmatprep.subr.mxu0 0.0
  %422 = vmatpush1.msra.mxu0 %v33
  %423 = vmatprep.subr.mxu0 0.0
  %424 = vmatpush1.msra.mxu0 %v34
  %425 = vmatprep.subr.mxu0 0.0
  %426 = vmatpush1.msra.mxu0 %v35
  %427 = vmatprep.subr.mxu0 0.0
  %428 = vmatpush1.msra.mxu0 0.0
  %429 = vmatprep.subr.mxu0 0.0
  %430 = vmatpush1.msra.mxu0 0.0
  %431 = vmatprep.subr.mxu0 0.0
  %432 = vmatpush1.msra.mxu0 0.0
  %433 = vmatprep.subr.mxu0 0.0
  %434 = vmatpush1.msra.mxu0 0.0
  %435 = vmatprep.subr.mxu0 0.0
  %436 = vmatpush1.msra.mxu0 0.0
  %437 = vmatprep.subr.mxu0 0.0
  %438 = vmatpush1.msra.mxu0 0.0
  %439 = vmatprep.subr.mxu0 0.0
  %440 = vmatpush1.msra.mxu0 0.0
  %441 = vmatprep.subr.mxu0 0.0
  %442 = vmatpush1.msra.mxu0 0.0
  %443 = vmatprep.subr.mxu0 0.0
  %444 = vmatpush1.msra.mxu0 0.0
  %445 = vmatprep.subr.mxu0 0.0
  %446 = vmatpush1.msra.mxu0 0.0
  %447 = vmatprep.subr.mxu0 0.0
  %448 = vmatpush1.msra.mxu0 0.0
  %449 = vmatprep.subr.mxu0 0.0
  %450 = vmatpush1.msra.mxu0 0.0
  %451 = vmatprep.subr.mxu0 0.0
  %452 = vmatpush1.msra.mxu0 0.0
  %453 = vmatprep.subr.mxu0 0.0
  %454 = vmatpush1.msra.mxu0 0.0
  %455 = vmatprep.subr.mxu0 0.0
  %456 = vmatpush1.msra.mxu0 0.0
  %457 = vmatprep.subr.mxu0 0.0
  %458 = vmatpush1.msra.mxu0 0.0
  %459 = vmatprep.subr.mxu0 0.0
  %460 = vmatpush1.msra.mxu0 0.0
  %461 = vmatprep.subr.mxu0 0.0
  %462 = vmatpush1.msra.mxu0 0.0
  %463 = vmatprep.subr.mxu0 0.0
  %464 = vmatpush1.msra.mxu0 0.0
  %465 = vmatprep.subr.mxu0 0.0
  %466 = vmatpush1.msra.mxu0 0.0
  %467 = vmatprep.subr.mxu0 0.0
  %468 = vmatpush1.msra.mxu0 0.0
  %469 = vmatprep.subr.mxu0 0.0
  %470 = vmatpush1.msra.mxu0 0.0
  %471 = vmatprep.subr.mxu0 0.0
  %472 = vmatpush1.msra.mxu0 0.0
  %473 = vmatprep.subr.mxu0 0.0
  %474 = vmatpush1.msra.mxu0 0.0
  %475 = vmatprep.subr.mxu0 0.0
  %476 = vmatpush1.msra.mxu0 0.0
  %477 = vmatprep.subr.mxu0 0.0
  %478 = vmatpush1.msra.mxu0 0.0
  %479 = vmatprep.subr.mxu0 0.0
  %480 = vmatpush1.msra.mxu0 0.0
  %481 = vmatprep.subr.mxu0 0.0
  %482 = vmatpush1.msra.mxu0 0.0
  %483 = vmatprep.mubr.f32.mxu0 0.0
  %484 = vmatmul.mubr.f32.gmra.mrb[0].mxu0 %v415
  %v485 = vpop.f32.mrb[0].mxu0
  %v486 = vadd.f32 0.0, %v485
  %v487 = vpop.f32.mrb[0].mxu0
  %488 = vmatprep.mubr.f32.mxu0 0.0
  %489 = vmatmul.mubr.f32.gmra.mrb[0].mxu0 %v417
  %v490 = vpop.f32.mrb[0].mxu0
  %v491 = vadd.f32 0.0, %v490
  %v492 = vpop.f32.mrb[0].mxu0
  %493 = vdwg.mxu0
  %v494 = vadd.f32 %v486, %v186
  %v495 = vadd.f32 %v491, %v186
  %496 = vst [vmem:[%s8] sm:$0xff] %v494
  %497 = vst [vmem:[%s8 + $0x8] sm:$0xff] %v495
  %v498 = vmul.f32 %v494, %v191
  %v499 = vmul.f32 %v495, %v191
  %v500 = vsub.f32 %v494, %v195
  %v501 = vsub.f32 %v495, %v196
  %v502 = vld [vmem:[%s1] sm:$0xff]
  %v503 = vld [vmem:[%s1 + $0x8] sm:$0xff]
  %v504 = vmul.f32 %v500, %v502
  %v505 = vmul.f32 %v501, %v503
  %v506 = vadd.f32 %v498, %v504
  %v507 = vadd.f32 %v499, %v505
  %v509 = vsel %vm197, %v506, 0
  %v512 = vsel %vm197, %v507, 0
  %514 = vmatprep.subr.mxu0 0.0
  %515 = vmatpush1.msra.mxu0 %v31
  %516 = vmatprep.subr.mxu0 0.0
  %517 = vmatpush1.msra.mxu0 0.0
  %518 = vmatprep.subr.mxu0 0.0
  %519 = vmatpush1.msra.mxu0 0.0
  %520 = vmatprep.subr.mxu0 0.0
  %521 = vmatpush1.msra.mxu0 0.0
  %522 = vmatprep.subr.mxu0 0.0
  %523 = vmatpush1.msra.mxu0 0.0
  %524 = vmatprep.subr.mxu0 0.0
  %525 = vmatpush1.msra.mxu0 0.0
  %526 = vmatprep.subr.mxu0 0.0
  %527 = vmatpush1.msra.mxu0 0.0
  %528 = vmatprep.subr.mxu0 0.0
  %529 = vmatpush1.msra.mxu0 0.0
  %530 = vmatprep.subr.mxu0 0.0
  %531 = vmatpush1.msra.mxu0 0.0
  %532 = vmatprep.subr.mxu0 0.0
  %533 = vmatpush1.msra.mxu0 0.0
  %534 = vmatprep.subr.mxu0 0.0
  %535 = vmatpush1.msra.mxu0 0.0
  %536 = vmatprep.subr.mxu0 0.0
  %537 = vmatpush1.msra.mxu0 0.0
  %538 = vmatprep.subr.mxu0 0.0
  %539 = vmatpush1.msra.mxu0 0.0
  %540 = vmatprep.subr.mxu0 0.0
  %541 = vmatpush1.msra.mxu0 0.0
  %542 = vmatprep.subr.mxu0 0.0
  %543 = vmatpush1.msra.mxu0 0.0
  %544 = vmatprep.subr.mxu0 0.0
  %545 = vmatpush1.msra.mxu0 0.0
  %546 = vmatprep.subr.mxu0 0.0
  %547 = vmatpush1.msra.mxu0 0.0
  %548 = vmatprep.subr.mxu0 0.0
  %549 = vmatpush1.msra.mxu0 0.0
  %550 = vmatprep.subr.mxu0 0.0
  %551 = vmatpush1.msra.mxu0 0.0
  %552 = vmatprep.subr.mxu0 0.0
  %553 = vmatpush1.msra.mxu0 0.0
  %554 = vmatprep.subr.mxu0 0.0
  %555 = vmatpush1.msra.mxu0 0.0
  %556 = vmatprep.subr.mxu0 0.0
  %557 = vmatpush1.msra.mxu0 0.0
  %558 = vmatprep.subr.mxu0 0.0
  %559 = vmatpush1.msra.mxu0 0.0
  %560 = vmatprep.subr.mxu0 0.0
  %561 = vmatpush1.msra.mxu0 0.0
  %562 = vmatprep.subr.mxu0 0.0
  %563 = vmatpush1.msra.mxu0 0.0
  %564 = vmatprep.subr.mxu0 0.0
  %565 = vmatpush1.msra.mxu0 0.0
  %566 = vmatprep.subr.mxu0 0.0
  %567 = vmatpush1.msra.mxu0 0.0
  %568 = vmatprep.subr.mxu0 0.0
  %569 = vmatpush1.msra.mxu0 0.0
  %570 = vmatprep.subr.mxu0 0.0
  %571 = vmatpush1.msra.mxu0 0.0
  %572 = vmatprep.subr.mxu0 0.0
  %573 = vmatpush1.msra.mxu0 0.0
  %574 = vmatprep.subr.mxu0 0.0
  %575 = vmatpush1.msra.mxu0 0.0
  %576 = vmatprep.subr.mxu0 0.0
  %577 = vmatpush1.msra.mxu0 0.0
  %578 = vmatprep.mubr.f32.mxu0 0.0
  %579 = vmatmul.mubr.f32.gmra.mrb[0].mxu0 %v509
  %v580 = vpop.f32.mrb[0].mxu0
  %v581 = vadd.f32 0.0, %v580
  %v582 = vpop.f32.mrb[0].mxu0
  %583 = vmatprep.mubr.f32.mxu0 0.0
  %584 = vmatmul.mubr.f32.gmra.mrb[0].mxu0 %v512
  %v585 = vpop.f32.mrb[0].mxu0
  %v586 = vadd.f32 0.0, %v585
  %v587 = vpop.f32.mrb[0].mxu0
  %588 = vdwg.mxu0
  %v589 = vadd.f32 %v155, %v581
  %v590 = vadd.f32 %v160, %v586
  %v591 = vadd.f32 %v589, %v486
  %v592 = vadd.f32 %v590, %v491
  %v593 = vxor.u32 %v591, 2147483648
  %v594 = vxor.u32 %v592, 2147483648
  %v595 = vmul.f32 %v593, 1.442695
  %v596 = vpow.pop %v595
  %v597 = vmul.f32 %v594, 1.442695
  %v598 = vpow.pop %v597
  %v599 = vadd.f32 %v596, 1.0
  %v600 = vadd.f32 %v598, 1.0
  %v601 = vrcp.pop %v599
  %v602 = vmul.f32 1.0, %v601
  %v603 = vrcp.pop %v600
  %v604 = vmul.f32 1.0, %v603
  %605 = vrot.lane.b32.xlu0 %v407, 32
  %v606 = vpop.permute.xlu0 %605
  %607 = vrot.lane.b32.xlu0 %v408, 32
  %v608 = vpop.permute.xlu0 %607
  %v611 = vmul.f32 %v602, %v606
  %v612 = vmul.f32 %v604, %v608
  %615 = vrot.lane.b32.xlu0 %v611, 64
  %v616 = vpop.permute.xlu0 %615
  %617 = vrot.lane.b32.xlu0 %v612, 64
  %v618 = vpop.permute.xlu0 %617
  %v619 = vsel %vm303, %v616, 0
  %v621 = vsel %vm303, %v618, 0
  %623 = vmatprep.subr.mxu0 0.0
  %624 = vmatpush1.msra.mxu0 %v36
  %625 = vmatprep.subr.mxu0 0.0
  %626 = vmatpush1.msra.mxu0 %v37
  %627 = vmatprep.subr.mxu0 0.0
  %628 = vmatpush1.msra.mxu0 %v38
  %629 = vmatprep.subr.mxu0 0.0
  %630 = vmatpush1.msra.mxu0 %v39
  %631 = vmatprep.subr.mxu0 0.0
  %632 = vmatpush1.msra.mxu0 0.0
  %633 = vmatprep.subr.mxu0 0.0
  %634 = vmatpush1.msra.mxu0 0.0
  %635 = vmatprep.subr.mxu0 0.0
  %636 = vmatpush1.msra.mxu0 0.0
  %637 = vmatprep.subr.mxu0 0.0
  %638 = vmatpush1.msra.mxu0 0.0
  %639 = vmatprep.subr.mxu0 0.0
  %640 = vmatpush1.msra.mxu0 0.0
  %641 = vmatprep.subr.mxu0 0.0
  %642 = vmatpush1.msra.mxu0 0.0
  %643 = vmatprep.subr.mxu0 0.0
  %644 = vmatpush1.msra.mxu0 0.0
  %645 = vmatprep.subr.mxu0 0.0
  %646 = vmatpush1.msra.mxu0 0.0
  %647 = vmatprep.subr.mxu0 0.0
  %648 = vmatpush1.msra.mxu0 0.0
  %649 = vmatprep.subr.mxu0 0.0
  %650 = vmatpush1.msra.mxu0 0.0
  %651 = vmatprep.subr.mxu0 0.0
  %652 = vmatpush1.msra.mxu0 0.0
  %653 = vmatprep.subr.mxu0 0.0
  %654 = vmatpush1.msra.mxu0 0.0
  %655 = vmatprep.subr.mxu0 0.0
  %656 = vmatpush1.msra.mxu0 0.0
  %657 = vmatprep.subr.mxu0 0.0
  %658 = vmatpush1.msra.mxu0 0.0
  %659 = vmatprep.subr.mxu0 0.0
  %660 = vmatpush1.msra.mxu0 0.0
  %661 = vmatprep.subr.mxu0 0.0
  %662 = vmatpush1.msra.mxu0 0.0
  %663 = vmatprep.subr.mxu0 0.0
  %664 = vmatpush1.msra.mxu0 0.0
  %665 = vmatprep.subr.mxu0 0.0
  %666 = vmatpush1.msra.mxu0 0.0
  %667 = vmatprep.subr.mxu0 0.0
  %668 = vmatpush1.msra.mxu0 0.0
  %669 = vmatprep.subr.mxu0 0.0
  %670 = vmatpush1.msra.mxu0 0.0
  %671 = vmatprep.subr.mxu0 0.0
  %672 = vmatpush1.msra.mxu0 0.0
  %673 = vmatprep.subr.mxu0 0.0
  %674 = vmatpush1.msra.mxu0 0.0
  %675 = vmatprep.subr.mxu0 0.0
  %676 = vmatpush1.msra.mxu0 0.0
  %677 = vmatprep.subr.mxu0 0.0
  %678 = vmatpush1.msra.mxu0 0.0
  %679 = vmatprep.subr.mxu0 0.0
  %680 = vmatpush1.msra.mxu0 0.0
  %681 = vmatprep.subr.mxu0 0.0
  %682 = vmatpush1.msra.mxu0 0.0
  %683 = vmatprep.subr.mxu0 0.0
  %684 = vmatpush1.msra.mxu0 0.0
  %685 = vmatprep.subr.mxu0 0.0
  %686 = vmatpush1.msra.mxu0 0.0
  %687 = vmatprep.mubr.f32.mxu0 0.0
  %688 = vmatmul.mubr.f32.gmra.mrb[0].mxu0 %v619
  %v689 = vpop.f32.mrb[0].mxu0
  %v690 = vadd.f32 0.0, %v689
  %v691 = vpop.f32.mrb[0].mxu0
  %692 = vmatprep.mubr.f32.mxu0 0.0
  %693 = vmatmul.mubr.f32.gmra.mrb[0].mxu0 %v621
  %v694 = vpop.f32.mrb[0].mxu0
  %v695 = vadd.f32 0.0, %v694
  %v696 = vpop.f32.mrb[0].mxu0
  %697 = vdwg.mxu0
  %700 = vrot.lane.b32.xlu0 %v690, 96
  %v701 = vpop.permute.xlu0 %700
  %702 = vrot.lane.b32.xlu0 %v695, 96
  %v703 = vpop.permute.xlu0 %702
  %v706 = vadd.f32 %v591, %v701
  %v707 = vadd.f32 %v592, %v703
  %v708 = vtanh.pop %v706
  %v709 = vtanh.pop %v707
  %v710 = vmul.f32 %v602, %v407
  %v711 = vmul.f32 %v604, %v408
  %v712 = vsub.f32 1.0, %v602
  %v713 = vsub.f32 1.0, %v604
  %716 = vrot.lane.b32.xlu0 %v708, 64
  %v717 = vpop.permute.xlu0 %716
  %718 = vrot.lane.b32.xlu0 %v709, 64
  %v719 = vpop.permute.xlu0 %718
  %v722 = vmul.f32 %v712, %v717
  %v723 = vmul.f32 %v713, %v719
  %v724 = vadd.f32 %v710, %v722
  %v725 = vadd.f32 %v711, %v723
  %728 = vrot.lane.b32.xlu0 %v724, 96
  %v729 = vpop.permute.xlu0 %728
  %730 = vrot.lane.b32.xlu0 %v725, 96
  %v731 = vpop.permute.xlu0 %730
  %v732 = vsel %vm303, %v729, 0
  %v734 = vsel %vm303, %v731, 0
  %736 = vmatprep.subr.mxu0 0.0
  %737 = vmatpush1.msra.mxu0 %v32
  %738 = vmatprep.subr.mxu0 0.0
  %739 = vmatpush1.msra.mxu0 %v33
  %740 = vmatprep.subr.mxu0 0.0
  %741 = vmatpush1.msra.mxu0 %v34
  %742 = vmatprep.subr.mxu0 0.0
  %743 = vmatpush1.msra.mxu0 %v35
  %744 = vmatprep.subr.mxu0 0.0
  %745 = vmatpush1.msra.mxu0 0.0
  %746 = vmatprep.subr.mxu0 0.0
  %747 = vmatpush1.msra.mxu0 0.0
  %748 = vmatprep.subr.mxu0 0.0
  %749 = vmatpush1.msra.mxu0 0.0
  %750 = vmatprep.subr.mxu0 0.0
  %751 = vmatpush1.msra.mxu0 0.0
  %752 = vmatprep.subr.mxu0 0.0
  %753 = vmatpush1.msra.mxu0 0.0
  %754 = vmatprep.subr.mxu0 0.0
  %755 = vmatpush1.msra.mxu0 0.0
  %756 = vmatprep.subr.mxu0 0.0
  %757 = vmatpush1.msra.mxu0 0.0
  %758 = vmatprep.subr.mxu0 0.0
  %759 = vmatpush1.msra.mxu0 0.0
  %760 = vmatprep.subr.mxu0 0.0
  %761 = vmatpush1.msra.mxu0 0.0
  %762 = vmatprep.subr.mxu0 0.0
  %763 = vmatpush1.msra.mxu0 0.0
  %764 = vmatprep.subr.mxu0 0.0
  %765 = vmatpush1.msra.mxu0 0.0
  %766 = vmatprep.subr.mxu0 0.0
  %767 = vmatpush1.msra.mxu0 0.0
  %768 = vmatprep.subr.mxu0 0.0
  %769 = vmatpush1.msra.mxu0 0.0
  %770 = vmatprep.subr.mxu0 0.0
  %771 = vmatpush1.msra.mxu0 0.0
  %772 = vmatprep.subr.mxu0 0.0
  %773 = vmatpush1.msra.mxu0 0.0
  %774 = vmatprep.subr.mxu0 0.0
  %775 = vmatpush1.msra.mxu0 0.0
  %776 = vmatprep.subr.mxu0 0.0
  %777 = vmatpush1.msra.mxu0 0.0
  %778 = vmatprep.subr.mxu0 0.0
  %779 = vmatpush1.msra.mxu0 0.0
  %780 = vmatprep.subr.mxu0 0.0
  %781 = vmatpush1.msra.mxu0 0.0
  %782 = vmatprep.subr.mxu0 0.0
  %783 = vmatpush1.msra.mxu0 0.0
  %784 = vmatprep.subr.mxu0 0.0
  %785 = vmatpush1.msra.mxu0 0.0
  %786 = vmatprep.subr.mxu0 0.0
  %787 = vmatpush1.msra.mxu0 0.0
  %788 = vmatprep.subr.mxu0 0.0
  %789 = vmatpush1.msra.mxu0 0.0
  %790 = vmatprep.subr.mxu0 0.0
  %791 = vmatpush1.msra.mxu0 0.0
  %792 = vmatprep.subr.mxu0 0.0
  %793 = vmatpush1.msra.mxu0 0.0
  %794 = vmatprep.subr.mxu0 0.0
  %795 = vmatpush1.msra.mxu0 0.0
  %796 = vmatprep.subr.mxu0 0.0
  %797 = vmatpush1.msra.mxu0 0.0
  %798 = vmatprep.subr.mxu0 0.0
  %799 = vmatpush1.msra.mxu0 0.0
  %800 = vmatprep.mubr.f32.mxu0 0.0
  %801 = vmatmul.mubr.f32.gmra.mrb[0].mxu0 %v732
  %v802 = vpop.f32.mrb[0].mxu0
  %v803 = vadd.f32 0.0, %v802
  %v804 = vpop.f32.mrb[0].mxu0
  %805 = vmatprep.mubr.f32.mxu0 0.0
  %806 = vmatmul.mubr.f32.gmra.mrb[0].mxu0 %v734
  %v807 = vpop.f32.mrb[0].mxu0
  %v808 = vadd.f32 0.0, %v807
  %v809 = vpop.f32.mrb[0].mxu0
  %810 = vdwg.mxu0
  %v811 = vadd.f32 %v803, %v186
  %v812 = vadd.f32 %v808, %v186
  %s813 = scalar_lea.vmem %s8, 16
  %814 = vst [vmem:[%s813] sm:$0xff] %v811
  %815 = vst [vmem:[%s813 + $0x8] sm:$0xff] %v812
  %v816 = vmul.f32 %v811, %v191
  %v817 = vmul.f32 %v812, %v191
  %v818 = vsub.f32 %v811, %v494
  %v819 = vsub.f32 %v812, %v495
  %s820 = scalar_lea.vmem %s1, 16
  %v821 = vld [vmem:[%s820] sm:$0xff]
  %v822 = vld [vmem:[%s820 + $0x8] sm:$0xff]
  %v823 = vmul.f32 %v818, %v821
  %v824 = vmul.f32 %v819, %v822
  %v825 = vadd.f32 %v816, %v823
  %v826 = vadd.f32 %v817, %v824
  %v828 = vsel %vm197, %v825, 0
  %v831 = vsel %vm197, %v826, 0
  %833 = vmatprep.subr.mxu0 0.0
  %834 = vmatpush1.msra.mxu0 %v31
  %835 = vmatprep.subr.mxu0 0.0
  %836 = vmatpush1.msra.mxu0 0.0
  %837 = vmatprep.subr.mxu0 0.0
  %838 = vmatpush1.msra.mxu0 0.0
  %839 = vmatprep.subr.mxu0 0.0
  %840 = vmatpush1.msra.mxu0 0.0
  %841 = vmatprep.subr.mxu0 0.0
  %842 = vmatpush1.msra.mxu0 0.0
  %843 = vmatprep.subr.mxu0 0.0
  %844 = vmatpush1.msra.mxu0 0.0
  %845 = vmatprep.subr.mxu0 0.0
  %846 = vmatpush1.msra.mxu0 0.0
  %847 = vmatprep.subr.mxu0 0.0
  %848 = vmatpush1.msra.mxu0 0.0
  %849 = vmatprep.subr.mxu0 0.0
  %850 = vmatpush1.msra.mxu0 0.0
  %851 = vmatprep.subr.mxu0 0.0
  %852 = vmatpush1.msra.mxu0 0.0
  %853 = vmatprep.subr.mxu0 0.0
  %854 = vmatpush1.msra.mxu0 0.0
  %855 = vmatprep.subr.mxu0 0.0
  %856 = vmatpush1.msra.mxu0 0.0
  %857 = vmatprep.subr.mxu0 0.0
  %858 = vmatpush1.msra.mxu0 0.0
  %859 = vmatprep.subr.mxu0 0.0
  %860 = vmatpush1.msra.mxu0 0.0
  %861 = vmatprep.subr.mxu0 0.0
  %862 = vmatpush1.msra.mxu0 0.0
  %863 = vmatprep.subr.mxu0 0.0
  %864 = vmatpush1.msra.mxu0 0.0
  %865 = vmatprep.subr.mxu0 0.0
  %866 = vmatpush1.msra.mxu0 0.0
  %867 = vmatprep.subr.mxu0 0.0
  %868 = vmatpush1.msra.mxu0 0.0
  %869 = vmatprep.subr.mxu0 0.0
  %870 = vmatpush1.msra.mxu0 0.0
  %871 = vmatprep.subr.mxu0 0.0
  %872 = vmatpush1.msra.mxu0 0.0
  %873 = vmatprep.subr.mxu0 0.0
  %874 = vmatpush1.msra.mxu0 0.0
  %875 = vmatprep.subr.mxu0 0.0
  %876 = vmatpush1.msra.mxu0 0.0
  %877 = vmatprep.subr.mxu0 0.0
  %878 = vmatpush1.msra.mxu0 0.0
  %879 = vmatprep.subr.mxu0 0.0
  %880 = vmatpush1.msra.mxu0 0.0
  %881 = vmatprep.subr.mxu0 0.0
  %882 = vmatpush1.msra.mxu0 0.0
  %883 = vmatprep.subr.mxu0 0.0
  %884 = vmatpush1.msra.mxu0 0.0
  %885 = vmatprep.subr.mxu0 0.0
  %886 = vmatpush1.msra.mxu0 0.0
  %887 = vmatprep.subr.mxu0 0.0
  %888 = vmatpush1.msra.mxu0 0.0
  %889 = vmatprep.subr.mxu0 0.0
  %890 = vmatpush1.msra.mxu0 0.0
  %891 = vmatprep.subr.mxu0 0.0
  %892 = vmatpush1.msra.mxu0 0.0
  %893 = vmatprep.subr.mxu0 0.0
  %894 = vmatpush1.msra.mxu0 0.0
  %895 = vmatprep.subr.mxu0 0.0
  %896 = vmatpush1.msra.mxu0 0.0
  %897 = vmatprep.mubr.f32.mxu0 0.0
  %898 = vmatmul.mubr.f32.gmra.mrb[0].mxu0 %v828
  %v899 = vpop.f32.mrb[0].mxu0
  %v900 = vadd.f32 0.0, %v899
  %v901 = vpop.f32.mrb[0].mxu0
  %902 = vmatprep.mubr.f32.mxu0 0.0
  %903 = vmatmul.mubr.f32.gmra.mrb[0].mxu0 %v831
  %v904 = vpop.f32.mrb[0].mxu0
  %v905 = vadd.f32 0.0, %v904
  %v906 = vpop.f32.mrb[0].mxu0
  %907 = vdwg.mxu0
  %v908 = vadd.f32 %v165, %v900
  %v909 = vadd.f32 %v170, %v905
  %v910 = vadd.f32 %v908, %v803
  %v911 = vadd.f32 %v909, %v808
  %v912 = vxor.u32 %v910, 2147483648
  %v913 = vxor.u32 %v911, 2147483648
  %v914 = vmul.f32 %v912, 1.442695
  %v915 = vpow.pop %v914
  %v916 = vmul.f32 %v913, 1.442695
  %v917 = vpow.pop %v916
  %v918 = vadd.f32 %v915, 1.0
  %v919 = vadd.f32 %v917, 1.0
  %v920 = vrcp.pop %v918
  %v921 = vmul.f32 1.0, %v920
  %v922 = vrcp.pop %v919
  %v923 = vmul.f32 1.0, %v922
  %924 = vrot.lane.b32.xlu0 %v724, 32
  %v925 = vpop.permute.xlu0 %924
  %926 = vrot.lane.b32.xlu0 %v725, 32
  %v927 = vpop.permute.xlu0 %926
  %v930 = vmul.f32 %v921, %v925
  %v931 = vmul.f32 %v923, %v927
  %934 = vrot.lane.b32.xlu0 %v930, 64
  %v935 = vpop.permute.xlu0 %934
  %936 = vrot.lane.b32.xlu0 %v931, 64
  %v937 = vpop.permute.xlu0 %936
  %v938 = vsel %vm303, %v935, 0
  %v940 = vsel %vm303, %v937, 0
  %942 = vmatprep.subr.mxu0 0.0
  %943 = vmatpush1.msra.mxu0 %v36
  %944 = vmatprep.subr.mxu0 0.0
  %945 = vmatpush1.msra.mxu0 %v37
  %946 = vmatprep.subr.mxu0 0.0
  %947 = vmatpush1.msra.mxu0 %v38
  %948 = vmatprep.subr.mxu0 0.0
  %949 = vmatpush1.msra.mxu0 %v39
  %950 = vmatprep.subr.mxu0 0.0
  %951 = vmatpush1.msra.mxu0 0.0
  %952 = vmatprep.subr.mxu0 0.0
  %953 = vmatpush1.msra.mxu0 0.0
  %954 = vmatprep.subr.mxu0 0.0
  %955 = vmatpush1.msra.mxu0 0.0
  %956 = vmatprep.subr.mxu0 0.0
  %957 = vmatpush1.msra.mxu0 0.0
  %958 = vmatprep.subr.mxu0 0.0
  %959 = vmatpush1.msra.mxu0 0.0
  %960 = vmatprep.subr.mxu0 0.0
  %961 = vmatpush1.msra.mxu0 0.0
  %962 = vmatprep.subr.mxu0 0.0
  %963 = vmatpush1.msra.mxu0 0.0
  %964 = vmatprep.subr.mxu0 0.0
  %965 = vmatpush1.msra.mxu0 0.0
  %966 = vmatprep.subr.mxu0 0.0
  %967 = vmatpush1.msra.mxu0 0.0
  %968 = vmatprep.subr.mxu0 0.0
  %969 = vmatpush1.msra.mxu0 0.0
  %970 = vmatprep.subr.mxu0 0.0
  %971 = vmatpush1.msra.mxu0 0.0
  %972 = vmatprep.subr.mxu0 0.0
  %973 = vmatpush1.msra.mxu0 0.0
  %974 = vmatprep.subr.mxu0 0.0
  %975 = vmatpush1.msra.mxu0 0.0
  %976 = vmatprep.subr.mxu0 0.0
  %977 = vmatpush1.msra.mxu0 0.0
  %978 = vmatprep.subr.mxu0 0.0
  %979 = vmatpush1.msra.mxu0 0.0
  %980 = vmatprep.subr.mxu0 0.0
  %981 = vmatpush1.msra.mxu0 0.0
  %982 = vmatprep.subr.mxu0 0.0
  %983 = vmatpush1.msra.mxu0 0.0
  %984 = vmatprep.subr.mxu0 0.0
  %985 = vmatpush1.msra.mxu0 0.0
  %986 = vmatprep.subr.mxu0 0.0
  %987 = vmatpush1.msra.mxu0 0.0
  %988 = vmatprep.subr.mxu0 0.0
  %989 = vmatpush1.msra.mxu0 0.0
  %990 = vmatprep.subr.mxu0 0.0
  %991 = vmatpush1.msra.mxu0 0.0
  %992 = vmatprep.subr.mxu0 0.0
  %993 = vmatpush1.msra.mxu0 0.0
  %994 = vmatprep.subr.mxu0 0.0
  %995 = vmatpush1.msra.mxu0 0.0
  %996 = vmatprep.subr.mxu0 0.0
  %997 = vmatpush1.msra.mxu0 0.0
  %998 = vmatprep.subr.mxu0 0.0
  %999 = vmatpush1.msra.mxu0 0.0
  %1000 = vmatprep.subr.mxu0 0.0
  %1001 = vmatpush1.msra.mxu0 0.0
  %1002 = vmatprep.subr.mxu0 0.0
  %1003 = vmatpush1.msra.mxu0 0.0
  %1004 = vmatprep.subr.mxu0 0.0
  %1005 = vmatpush1.msra.mxu0 0.0
  %1006 = vmatprep.mubr.f32.mxu0 0.0
  %1007 = vmatmul.mubr.f32.gmra.mrb[0].mxu0 %v938
  %v1008 = vpop.f32.mrb[0].mxu0
  %v1009 = vadd.f32 0.0, %v1008
  %v1010 = vpop.f32.mrb[0].mxu0
  %1011 = vmatprep.mubr.f32.mxu0 0.0
  %1012 = vmatmul.mubr.f32.gmra.mrb[0].mxu0 %v940
  %v1013 = vpop.f32.mrb[0].mxu0
  %v1014 = vadd.f32 0.0, %v1013
  %v1015 = vpop.f32.mrb[0].mxu0
  %1016 = vdwg.mxu0
  %1019 = vrot.lane.b32.xlu0 %v1009, 96
  %v1020 = vpop.permute.xlu0 %1019
  %1021 = vrot.lane.b32.xlu0 %v1014, 96
  %v1022 = vpop.permute.xlu0 %1021
  %v1025 = vadd.f32 %v910, %v1020
  %v1026 = vadd.f32 %v911, %v1022
  %v1027 = vtanh.pop %v1025
  %v1028 = vtanh.pop %v1026
  %v1029 = vmul.f32 %v921, %v724
  %v1030 = vmul.f32 %v923, %v725
  %v1031 = vsub.f32 1.0, %v921
  %v1032 = vsub.f32 1.0, %v923
  %1035 = vrot.lane.b32.xlu0 %v1027, 64
  %v1036 = vpop.permute.xlu0 %1035
  %1037 = vrot.lane.b32.xlu0 %v1028, 64
  %v1038 = vpop.permute.xlu0 %1037
  %v1041 = vmul.f32 %v1031, %v1036
  %v1042 = vmul.f32 %v1032, %v1038
  %v1043 = vadd.f32 %v1029, %v1041
  %v1044 = vadd.f32 %v1030, %v1042
  %1047 = vrot.lane.b32.xlu0 %v1043, 96
  %v1048 = vpop.permute.xlu0 %1047
  %1049 = vrot.lane.b32.xlu0 %v1044, 96
  %v1050 = vpop.permute.xlu0 %1049
  %v1051 = vsel %vm303, %v1048, 0
  %v1053 = vsel %vm303, %v1050, 0
  %1055 = vmatprep.subr.mxu0 0.0
  %1056 = vmatpush1.msra.mxu0 %v32
  %1057 = vmatprep.subr.mxu0 0.0
  %1058 = vmatpush1.msra.mxu0 %v33
  %1059 = vmatprep.subr.mxu0 0.0
  %1060 = vmatpush1.msra.mxu0 %v34
  %1061 = vmatprep.subr.mxu0 0.0
  %1062 = vmatpush1.msra.mxu0 %v35
  %1063 = vmatprep.subr.mxu0 0.0
  %1064 = vmatpush1.msra.mxu0 0.0
  %1065 = vmatprep.subr.mxu0 0.0
  %1066 = vmatpush1.msra.mxu0 0.0
  %1067 = vmatprep.subr.mxu0 0.0
  %1068 = vmatpush1.msra.mxu0 0.0
  %1069 = vmatprep.subr.mxu0 0.0
  %1070 = vmatpush1.msra.mxu0 0.0
  %1071 = vmatprep.subr.mxu0 0.0
  %1072 = vmatpush1.msra.mxu0 0.0
  %1073 = vmatprep.subr.mxu0 0.0
  %1074 = vmatpush1.msra.mxu0 0.0
  %1075 = vmatprep.subr.mxu0 0.0
  %1076 = vmatpush1.msra.mxu0 0.0
  %1077 = vmatprep.subr.mxu0 0.0
  %1078 = vmatpush1.msra.mxu0 0.0
  %1079 = vmatprep.subr.mxu0 0.0
  %1080 = vmatpush1.msra.mxu0 0.0
  %1081 = vmatprep.subr.mxu0 0.0
  %1082 = vmatpush1.msra.mxu0 0.0
  %1083 = vmatprep.subr.mxu0 0.0
  %1084 = vmatpush1.msra.mxu0 0.0
  %1085 = vmatprep.subr.mxu0 0.0
  %1086 = vmatpush1.msra.mxu0 0.0
  %1087 = vmatprep.subr.mxu0 0.0
  %1088 = vmatpush1.msra.mxu0 0.0
  %1089 = vmatprep.subr.mxu0 0.0
  %1090 = vmatpush1.msra.mxu0 0.0
  %1091 = vmatprep.subr.mxu0 0.0
  %1092 = vmatpush1.msra.mxu0 0.0
  %1093 = vmatprep.subr.mxu0 0.0
  %1094 = vmatpush1.msra.mxu0 0.0
  %1095 = vmatprep.subr.mxu0 0.0
  %1096 = vmatpush1.msra.mxu0 0.0
  %1097 = vmatprep.subr.mxu0 0.0
  %1098 = vmatpush1.msra.mxu0 0.0
  %1099 = vmatprep.subr.mxu0 0.0
  %1100 = vmatpush1.msra.mxu0 0.0
  %1101 = vmatprep.subr.mxu0 0.0
  %1102 = vmatpush1.msra.mxu0 0.0
  %1103 = vmatprep.subr.mxu0 0.0
  %1104 = vmatpush1.msra.mxu0 0.0
  %1105 = vmatprep.subr.mxu0 0.0
  %1106 = vmatpush1.msra.mxu0 0.0
  %1107 = vmatprep.subr.mxu0 0.0
  %1108 = vmatpush1.msra.mxu0 0.0
  %1109 = vmatprep.subr.mxu0 0.0
  %1110 = vmatpush1.msra.mxu0 0.0
  %1111 = vmatprep.subr.mxu0 0.0
  %1112 = vmatpush1.msra.mxu0 0.0
  %1113 = vmatprep.subr.mxu0 0.0
  %1114 = vmatpush1.msra.mxu0 0.0
  %1115 = vmatprep.subr.mxu0 0.0
  %1116 = vmatpush1.msra.mxu0 0.0
  %1117 = vmatprep.subr.mxu0 0.0
  %1118 = vmatpush1.msra.mxu0 0.0
  %1119 = vmatprep.mubr.f32.mxu0 0.0
  %1120 = vmatmul.mubr.f32.gmra.mrb[0].mxu0 %v1051
  %v1121 = vpop.f32.mrb[0].mxu0
  %v1122 = vadd.f32 0.0, %v1121
  %v1123 = vpop.f32.mrb[0].mxu0
  %1124 = vmatprep.mubr.f32.mxu0 0.0
  %1125 = vmatmul.mubr.f32.gmra.mrb[0].mxu0 %v1053
  %v1126 = vpop.f32.mrb[0].mxu0
  %v1127 = vadd.f32 0.0, %v1126
  %v1128 = vpop.f32.mrb[0].mxu0
  %1129 = vdwg.mxu0
  %v1130 = vadd.f32 %v1122, %v186
  %v1131 = vadd.f32 %v1127, %v186
  %s1132 = scalar_lea.vmem %s8, 32
  %1133 = vst [vmem:[%s1132] sm:$0xff] %v1130
  %1134 = vst [vmem:[%s1132 + $0x8] sm:$0xff] %v1131
  %v1135 = vmul.f32 %v1130, %v191
  %v1136 = vmul.f32 %v1131, %v191
  %v1137 = vsub.f32 %v1130, %v811
  %v1138 = vsub.f32 %v1131, %v812
  %s1139 = scalar_lea.vmem %s1, 32
  %v1140 = vld [vmem:[%s1139] sm:$0xff]
  %v1141 = vld [vmem:[%s1139 + $0x8] sm:$0xff]
  %v1142 = vmul.f32 %v1137, %v1140
  %v1143 = vmul.f32 %v1138, %v1141
  %v1144 = vadd.f32 %v1135, %v1142
  %v1145 = vadd.f32 %v1136, %v1143
  %v1147 = vsel %vm197, %v1144, 0
  %v1150 = vsel %vm197, %v1145, 0
  %1152 = vmatprep.subr.mxu0 0.0
  %1153 = vmatpush1.msra.mxu0 %v31
  %1154 = vmatprep.subr.mxu0 0.0
  %1155 = vmatpush1.msra.mxu0 0.0
  %1156 = vmatprep.subr.mxu0 0.0
  %1157 = vmatpush1.msra.mxu0 0.0
  %1158 = vmatprep.subr.mxu0 0.0
  %1159 = vmatpush1.msra.mxu0 0.0
  %1160 = vmatprep.subr.mxu0 0.0
  %1161 = vmatpush1.msra.mxu0 0.0
  %1162 = vmatprep.subr.mxu0 0.0
  %1163 = vmatpush1.msra.mxu0 0.0
  %1164 = vmatprep.subr.mxu0 0.0
  %1165 = vmatpush1.msra.mxu0 0.0
  %1166 = vmatprep.subr.mxu0 0.0
  %1167 = vmatpush1.msra.mxu0 0.0
  %1168 = vmatprep.subr.mxu0 0.0
  %1169 = vmatpush1.msra.mxu0 0.0
  %1170 = vmatprep.subr.mxu0 0.0
  %1171 = vmatpush1.msra.mxu0 0.0
  %1172 = vmatprep.subr.mxu0 0.0
  %1173 = vmatpush1.msra.mxu0 0.0
  %1174 = vmatprep.subr.mxu0 0.0
  %1175 = vmatpush1.msra.mxu0 0.0
  %1176 = vmatprep.subr.mxu0 0.0
  %1177 = vmatpush1.msra.mxu0 0.0
  %1178 = vmatprep.subr.mxu0 0.0
  %1179 = vmatpush1.msra.mxu0 0.0
  %1180 = vmatprep.subr.mxu0 0.0
  %1181 = vmatpush1.msra.mxu0 0.0
  %1182 = vmatprep.subr.mxu0 0.0
  %1183 = vmatpush1.msra.mxu0 0.0
  %1184 = vmatprep.subr.mxu0 0.0
  %1185 = vmatpush1.msra.mxu0 0.0
  %1186 = vmatprep.subr.mxu0 0.0
  %1187 = vmatpush1.msra.mxu0 0.0
  %1188 = vmatprep.subr.mxu0 0.0
  %1189 = vmatpush1.msra.mxu0 0.0
  %1190 = vmatprep.subr.mxu0 0.0
  %1191 = vmatpush1.msra.mxu0 0.0
  %1192 = vmatprep.subr.mxu0 0.0
  %1193 = vmatpush1.msra.mxu0 0.0
  %1194 = vmatprep.subr.mxu0 0.0
  %1195 = vmatpush1.msra.mxu0 0.0
  %1196 = vmatprep.subr.mxu0 0.0
  %1197 = vmatpush1.msra.mxu0 0.0
  %1198 = vmatprep.subr.mxu0 0.0
  %1199 = vmatpush1.msra.mxu0 0.0
  %1200 = vmatprep.subr.mxu0 0.0
  %1201 = vmatpush1.msra.mxu0 0.0
  %1202 = vmatprep.subr.mxu0 0.0
  %1203 = vmatpush1.msra.mxu0 0.0
  %1204 = vmatprep.subr.mxu0 0.0
  %1205 = vmatpush1.msra.mxu0 0.0
  %1206 = vmatprep.subr.mxu0 0.0
  %1207 = vmatpush1.msra.mxu0 0.0
  %1208 = vmatprep.subr.mxu0 0.0
  %1209 = vmatpush1.msra.mxu0 0.0
  %1210 = vmatprep.subr.mxu0 0.0
  %1211 = vmatpush1.msra.mxu0 0.0
  %1212 = vmatprep.subr.mxu0 0.0
  %1213 = vmatpush1.msra.mxu0 0.0
  %1214 = vmatprep.subr.mxu0 0.0
  %1215 = vmatpush1.msra.mxu0 0.0
  %1216 = vmatprep.mubr.f32.mxu0 0.0
  %1217 = vmatmul.mubr.f32.gmra.mrb[0].mxu0 %v1147
  %v1218 = vpop.f32.mrb[0].mxu0
  %v1219 = vadd.f32 0.0, %v1218
  %v1220 = vpop.f32.mrb[0].mxu0
  %1221 = vmatprep.mubr.f32.mxu0 0.0
  %1222 = vmatmul.mubr.f32.gmra.mrb[0].mxu0 %v1150
  %v1223 = vpop.f32.mrb[0].mxu0
  %v1224 = vadd.f32 0.0, %v1223
  %v1225 = vpop.f32.mrb[0].mxu0
  %1226 = vdwg.mxu0
  %v1227 = vadd.f32 %v175, %v1219
  %v1228 = vadd.f32 %v180, %v1224
  %v1229 = vadd.f32 %v1227, %v1122
  %v1230 = vadd.f32 %v1228, %v1127
  %v1231 = vxor.u32 %v1229, 2147483648
  %v1232 = vxor.u32 %v1230, 2147483648
  %v1233 = vmul.f32 %v1231, 1.442695
  %v1234 = vpow.pop %v1233
  %v1235 = vmul.f32 %v1232, 1.442695
  %v1236 = vpow.pop %v1235
  %v1237 = vadd.f32 %v1234, 1.0
  %v1238 = vadd.f32 %v1236, 1.0
  %v1239 = vrcp.pop %v1237
  %v1240 = vmul.f32 1.0, %v1239
  %v1241 = vrcp.pop %v1238
  %v1242 = vmul.f32 1.0, %v1241
  %1243 = vrot.lane.b32.xlu0 %v1043, 32
  %v1244 = vpop.permute.xlu0 %1243
  %1245 = vrot.lane.b32.xlu0 %v1044, 32
  %v1246 = vpop.permute.xlu0 %1245
  %v1249 = vmul.f32 %v1240, %v1244
  %v1250 = vmul.f32 %v1242, %v1246
  %1253 = vrot.lane.b32.xlu0 %v1249, 64
  %v1254 = vpop.permute.xlu0 %1253
  %1255 = vrot.lane.b32.xlu0 %v1250, 64
  %v1256 = vpop.permute.xlu0 %1255
  %v1257 = vsel %vm303, %v1254, 0
  %v1259 = vsel %vm303, %v1256, 0
  %1261 = vmatprep.subr.mxu0 0.0
  %1262 = vmatpush1.msra.mxu0 %v36
  %1263 = vmatprep.subr.mxu0 0.0
  %1264 = vmatpush1.msra.mxu0 %v37
  %1265 = vmatprep.subr.mxu0 0.0
  %1266 = vmatpush1.msra.mxu0 %v38
  %1267 = vmatprep.subr.mxu0 0.0
  %1268 = vmatpush1.msra.mxu0 %v39
  %1269 = vmatprep.subr.mxu0 0.0
  %1270 = vmatpush1.msra.mxu0 0.0
  %1271 = vmatprep.subr.mxu0 0.0
  %1272 = vmatpush1.msra.mxu0 0.0
  %1273 = vmatprep.subr.mxu0 0.0
  %1274 = vmatpush1.msra.mxu0 0.0
  %1275 = vmatprep.subr.mxu0 0.0
  %1276 = vmatpush1.msra.mxu0 0.0
  %1277 = vmatprep.subr.mxu0 0.0
  %1278 = vmatpush1.msra.mxu0 0.0
  %1279 = vmatprep.subr.mxu0 0.0
  %1280 = vmatpush1.msra.mxu0 0.0
  %1281 = vmatprep.subr.mxu0 0.0
  %1282 = vmatpush1.msra.mxu0 0.0
  %1283 = vmatprep.subr.mxu0 0.0
  %1284 = vmatpush1.msra.mxu0 0.0
  %1285 = vmatprep.subr.mxu0 0.0
  %1286 = vmatpush1.msra.mxu0 0.0
  %1287 = vmatprep.subr.mxu0 0.0
  %1288 = vmatpush1.msra.mxu0 0.0
  %1289 = vmatprep.subr.mxu0 0.0
  %1290 = vmatpush1.msra.mxu0 0.0
  %1291 = vmatprep.subr.mxu0 0.0
  %1292 = vmatpush1.msra.mxu0 0.0
  %1293 = vmatprep.subr.mxu0 0.0
  %1294 = vmatpush1.msra.mxu0 0.0
  %1295 = vmatprep.subr.mxu0 0.0
  %1296 = vmatpush1.msra.mxu0 0.0
  %1297 = vmatprep.subr.mxu0 0.0
  %1298 = vmatpush1.msra.mxu0 0.0
  %1299 = vmatprep.subr.mxu0 0.0
  %1300 = vmatpush1.msra.mxu0 0.0
  %1301 = vmatprep.subr.mxu0 0.0
  %1302 = vmatpush1.msra.mxu0 0.0
  %1303 = vmatprep.subr.mxu0 0.0
  %1304 = vmatpush1.msra.mxu0 0.0
  %1305 = vmatprep.subr.mxu0 0.0
  %1306 = vmatpush1.msra.mxu0 0.0
  %1307 = vmatprep.subr.mxu0 0.0
  %1308 = vmatpush1.msra.mxu0 0.0
  %1309 = vmatprep.subr.mxu0 0.0
  %1310 = vmatpush1.msra.mxu0 0.0
  %1311 = vmatprep.subr.mxu0 0.0
  %1312 = vmatpush1.msra.mxu0 0.0
  %1313 = vmatprep.subr.mxu0 0.0
  %1314 = vmatpush1.msra.mxu0 0.0
  %1315 = vmatprep.subr.mxu0 0.0
  %1316 = vmatpush1.msra.mxu0 0.0
  %1317 = vmatprep.subr.mxu0 0.0
  %1318 = vmatpush1.msra.mxu0 0.0
  %1319 = vmatprep.subr.mxu0 0.0
  %1320 = vmatpush1.msra.mxu0 0.0
  %1321 = vmatprep.subr.mxu0 0.0
  %1322 = vmatpush1.msra.mxu0 0.0
  %1323 = vmatprep.subr.mxu0 0.0
  %1324 = vmatpush1.msra.mxu0 0.0
  %1325 = vmatprep.mubr.f32.mxu0 0.0
  %1326 = vmatmul.mubr.f32.gmra.mrb[0].mxu0 %v1257
  %v1327 = vpop.f32.mrb[0].mxu0
  %v1328 = vadd.f32 0.0, %v1327
  %v1329 = vpop.f32.mrb[0].mxu0
  %1330 = vmatprep.mubr.f32.mxu0 0.0
  %1331 = vmatmul.mubr.f32.gmra.mrb[0].mxu0 %v1259
  %v1332 = vpop.f32.mrb[0].mxu0
  %v1333 = vadd.f32 0.0, %v1332
  %v1334 = vpop.f32.mrb[0].mxu0
  %1335 = vdwg.mxu0
  %1338 = vrot.lane.b32.xlu0 %v1328, 96
  %v1339 = vpop.permute.xlu0 %1338
  %1340 = vrot.lane.b32.xlu0 %v1333, 96
  %v1341 = vpop.permute.xlu0 %1340
  %v1344 = vadd.f32 %v1229, %v1339
  %v1345 = vadd.f32 %v1230, %v1341
  %v1346 = vtanh.pop %v1344
  %v1347 = vtanh.pop %v1345
  %v1348 = vmul.f32 %v1240, %v1043
  %v1349 = vmul.f32 %v1242, %v1044
  %v1350 = vsub.f32 1.0, %v1240
  %v1351 = vsub.f32 1.0, %v1242
  %1354 = vrot.lane.b32.xlu0 %v1346, 64
  %v1355 = vpop.permute.xlu0 %1354
  %1356 = vrot.lane.b32.xlu0 %v1347, 64
  %v1357 = vpop.permute.xlu0 %1356
  %v1360 = vmul.f32 %v1350, %v1355
  %v1361 = vmul.f32 %v1351, %v1357
  %v1362 = vadd.f32 %v1348, %v1360
  %v1363 = vadd.f32 %v1349, %v1361
  %1366 = vrot.lane.b32.xlu0 %v1362, 96
  %v1367 = vpop.permute.xlu0 %1366
  %1368 = vrot.lane.b32.xlu0 %v1363, 96
  %v1369 = vpop.permute.xlu0 %1368
  %v1370 = vsel %vm303, %v1367, 0
  %v1372 = vsel %vm303, %v1369, 0
  %1374 = vmatprep.subr.mxu0 0.0
  %1375 = vmatpush1.msra.mxu0 %v32
  %1376 = vmatprep.subr.mxu0 0.0
  %1377 = vmatpush1.msra.mxu0 %v33
  %1378 = vmatprep.subr.mxu0 0.0
  %1379 = vmatpush1.msra.mxu0 %v34
  %1380 = vmatprep.subr.mxu0 0.0
  %1381 = vmatpush1.msra.mxu0 %v35
  %1382 = vmatprep.subr.mxu0 0.0
  %1383 = vmatpush1.msra.mxu0 0.0
  %1384 = vmatprep.subr.mxu0 0.0
  %1385 = vmatpush1.msra.mxu0 0.0
  %1386 = vmatprep.subr.mxu0 0.0
  %1387 = vmatpush1.msra.mxu0 0.0
  %1388 = vmatprep.subr.mxu0 0.0
  %1389 = vmatpush1.msra.mxu0 0.0
  %1390 = vmatprep.subr.mxu0 0.0
  %1391 = vmatpush1.msra.mxu0 0.0
  %1392 = vmatprep.subr.mxu0 0.0
  %1393 = vmatpush1.msra.mxu0 0.0
  %1394 = vmatprep.subr.mxu0 0.0
  %1395 = vmatpush1.msra.mxu0 0.0
  %1396 = vmatprep.subr.mxu0 0.0
  %1397 = vmatpush1.msra.mxu0 0.0
  %1398 = vmatprep.subr.mxu0 0.0
  %1399 = vmatpush1.msra.mxu0 0.0
  %1400 = vmatprep.subr.mxu0 0.0
  %1401 = vmatpush1.msra.mxu0 0.0
  %1402 = vmatprep.subr.mxu0 0.0
  %1403 = vmatpush1.msra.mxu0 0.0
  %1404 = vmatprep.subr.mxu0 0.0
  %1405 = vmatpush1.msra.mxu0 0.0
  %1406 = vmatprep.subr.mxu0 0.0
  %1407 = vmatpush1.msra.mxu0 0.0
  %1408 = vmatprep.subr.mxu0 0.0
  %1409 = vmatpush1.msra.mxu0 0.0
  %1410 = vmatprep.subr.mxu0 0.0
  %1411 = vmatpush1.msra.mxu0 0.0
  %1412 = vmatprep.subr.mxu0 0.0
  %1413 = vmatpush1.msra.mxu0 0.0
  %1414 = vmatprep.subr.mxu0 0.0
  %1415 = vmatpush1.msra.mxu0 0.0
  %1416 = vmatprep.subr.mxu0 0.0
  %1417 = vmatpush1.msra.mxu0 0.0
  %1418 = vmatprep.subr.mxu0 0.0
  %1419 = vmatpush1.msra.mxu0 0.0
  %1420 = vmatprep.subr.mxu0 0.0
  %1421 = vmatpush1.msra.mxu0 0.0
  %1422 = vmatprep.subr.mxu0 0.0
  %1423 = vmatpush1.msra.mxu0 0.0
  %1424 = vmatprep.subr.mxu0 0.0
  %1425 = vmatpush1.msra.mxu0 0.0
  %1426 = vmatprep.subr.mxu0 0.0
  %1427 = vmatpush1.msra.mxu0 0.0
  %1428 = vmatprep.subr.mxu0 0.0
  %1429 = vmatpush1.msra.mxu0 0.0
  %1430 = vmatprep.subr.mxu0 0.0
  %1431 = vmatpush1.msra.mxu0 0.0
  %1432 = vmatprep.subr.mxu0 0.0
  %1433 = vmatpush1.msra.mxu0 0.0
  %1434 = vmatprep.subr.mxu0 0.0
  %1435 = vmatpush1.msra.mxu0 0.0
  %1436 = vmatprep.subr.mxu0 0.0
  %1437 = vmatpush1.msra.mxu0 0.0
  %1438 = vmatprep.mubr.f32.mxu0 0.0
  %1439 = vmatmul.mubr.f32.gmra.mrb[0].mxu0 %v1370
  %v1440 = vpop.f32.mrb[0].mxu0
  %v1441 = vadd.f32 %v186, %v1440
  %v1442 = vpop.f32.mrb[0].mxu0
  %1443 = vmatprep.mubr.f32.mxu0 0.0
  %1444 = vmatmul.mubr.f32.gmra.mrb[0].mxu0 %v1372
  %v1445 = vpop.f32.mrb[0].mxu0
  %v1446 = vadd.f32 %v186, %v1445
  %v1447 = vpop.f32.mrb[0].mxu0
  %1448 = vdwg.mxu0
  %s1449 = scalar_lea.vmem %s8, 48
  %1450 = vst [vmem:[%s1449] sm:$0xff] %v1441
  %1451 = vst [vmem:[%s1449 + $0x8] sm:$0xff] %v1446
  // Predicated region
  $region34: #{autoreg_u_forward.1} parent=0 // pred_check
    _
  $region35: #{autoreg_u_forward.1} parent=0 // pred_check_branch
    %1453 = sbr.rel (0) target = $region37
  $region36: #{autoreg_u_forward.1} parent=0 // pred_region
    _
  $region37: #{autoreg_u_forward.1} parent=0 // pred_fallthru
    _
  // Predicated region
  $region38: #{autoreg_u_forward.1} parent=0 // pred_check
    _
  $region39: #{autoreg_u_forward.1} parent=0 // pred_check_branch
    %1455 = sbr.rel (0) target = $region41
  $region40: #{autoreg_u_forward.1} parent=0 // pred_region
    _
  $region41: #{autoreg_u_forward.1} parent=0 // pred_fallthru
    _

</llo_original>
